<compile_context>
chip_gen: v5e
topology: v5e:2x2
jax: 0.10.0
libtpu: 0.0.40
codegen_flags: <defaults>
</compile_context>

<pallas_src>
import functools
import math

import jax
import jax.numpy as jnp
from jax.experimental import pallas as pl
from jax.experimental.pallas import tpu as pltpu

_MM_DTYPE = jnp.bfloat16   # MXU operand dtype (accumulation is always f32)


# --------------------------------------------------------------------------
# In-kernel math helpers
# --------------------------------------------------------------------------

def _erf_approx(x):
    # Abramowitz & Stegun 7.1.26 (max abs error ~1.5e-7); divide -> EUP reciprocal.
    a1, a2, a3, a4, a5 = 0.254829592, -0.284496736, 1.421413741, -1.453152027, 1.061405429
    p = 0.3275911
    ax = jnp.abs(x)
    t = pl.reciprocal(1.0 + p * ax, approx=True)
    poly = ((((a5 * t + a4) * t + a3) * t + a2) * t + a1) * t
    y = 1.0 - poly * jnp.exp(-ax * ax)
    return jnp.where(x < 0.0, -y, y)


def _gelu_exact(x):
    return 0.5 * x * (1.0 + _erf_approx(x * (1.0 / math.sqrt(2.0))))


def _layer_norm(z, g, b, eps=1e-5):
    mu = jnp.mean(z, axis=-1, keepdims=True)
    var = jnp.mean((z - mu) ** 2, axis=-1, keepdims=True)
    return (z - mu) * jax.lax.rsqrt(var + eps) * g + b


# --------------------------------------------------------------------------
# Fused ViT kernel: grid = (B/Bb, L), L innermost
# --------------------------------------------------------------------------

def _vit_kernel(patches_ref, proj_w_ref, proj_b_ref, cls_ref, pos_ref,
                wqkv_ref, w0_ref, g1_ref, be1_ref, w1_ref, b1_ref,
                w2_ref, b2_ref, g2_ref, be2_ref, head_w_ref, head_b_ref,
                o_ref, x_sc, qkv_sc, ctx_sc, *, heads, dim_head):
    l = pl.program_id(1)
    last_l = pl.num_programs(1) - 1

    bb, t_tok, _ = patches_ref.shape
    n_tok = t_tok + 1
    dh = dim_head
    hd = heads * dh
    scale = dh ** -0.5

    # ---- first layer step: patch projection + CLS + positional embedding, written
    #      straight into the VMEM-resident residual stream (no HBM round trip) ----
    @pl.when(l == 0)
    def _():
        cls_row = cls_ref[...] + pos_ref[0:1, :]                   # (1, D) f32
        pos_tok = pos_ref[1:, :]                                   # (T, D) f32
        for b in range(bb):
            proj = jnp.dot(patches_ref[b], proj_w_ref[...],
                           preferred_element_type=jnp.float32) + proj_b_ref[...]
            x_sc[pl.ds(b * n_tok, 1), :] = cls_row
            x_sc[pl.ds(b * n_tok + 1, t_tok), :] = proj + pos_tok

    # ---- transformer layer l (post-norm block, dropout = 0) ----
    x2 = x_sc[...]                                  # (Bb*N, D) f32 residual stream

    # QKV projection: ONE wide MXU matmul over all Bb*N tokens.
    qkv_sc[...] = jnp.dot(x2.astype(_MM_DTYPE), wqkv_ref[0],
                          preferred_element_type=jnp.float32)      # (Bb*N, 3*hd)

    # Per-(batch, head) QK^T / softmax / P@V.  Splits are VMEM loads/stores at static
    # offsets; 1/sqrt(dh) folded into q; softmax divide on the EUP reciprocal.
    for b in range(bb):
        rows = pl.ds(b * n_tok, n_tok)
        for h in range(heads):
            q = (qkv_sc[rows, pl.ds(h * dh, dh)] * scale).astype(_MM_DTYPE)
            k = qkv_sc[rows, pl.ds(hd + h * dh, dh)].astype(_MM_DTYPE)
            v = qkv_sc[rows, pl.ds(2 * hd + h * dh, dh)].astype(_MM_DTYPE)
            s = jnp.einsum("nd,md->nm", q, k, preferred_element_type=jnp.float32)
            s = s - jnp.max(s, axis=-1, keepdims=True)
            p = jnp.exp(s)
            inv = pl.reciprocal(jnp.sum(p, axis=-1, keepdims=True), approx=True)
            ctx = jnp.einsum("nm,md->nd", p.astype(_MM_DTYPE), v,
                             preferred_element_type=jnp.float32) * inv
            ctx_sc[rows, pl.ds(h * dh, dh)] = ctx

    # Output projection: ONE (Bb*N, hd) x (hd, D) matmul (W0 has no bias).
    mhsa = jnp.dot(ctx_sc[...].astype(_MM_DTYPE), w0_ref[0],
                   preferred_element_type=jnp.float32)              # (Bb*N, D)
    y = _layer_norm(mhsa + x2, g1_ref[0], be1_ref[0])

    # Feed-forward.
    h1 = jnp.dot(y.astype(_MM_DTYPE), w1_ref[0],
                 preferred_element_type=jnp.float32) + b1_ref[0]
    h1 = _gelu_exact(h1)
    ff = jnp.dot(h1.astype(_MM_DTYPE), w2_ref[0],
                 preferred_element_type=jnp.float32) + b2_ref[0]
    out = _layer_norm(ff + y, g2_ref[0], be2_ref[0])

    x_sc[...] = out                                  # resident for layer l+1

    # ---- classification head fused into the last layer ----
    @pl.when(l == last_l)
    def _():
        for b in range(bb):
            cls_tok = x_sc[pl.ds(b * n_tok, 1), :]                  # (1, D)
            logits = jnp.dot(cls_tok.astype(_MM_DTYPE), head_w_ref[...],
                             preferred_element_type=jnp.float32) + head_b_ref[...]
            o_ref[b] = logits.astype(o_ref.dtype)


def pallas_vit_forward(img, params, *, patch_dim, heads, dim_head, batch_block=None):
    """Full ViT forward (logits) as one pallas_call.  img: (B, C, H, W) f32."""
    patches = patchify(img, patch_dim).astype(_MM_DTYPE)   # bf16 activations: half DMA
    B, T, token_dim = patches.shape
    D = params["proj_w"].shape[1]
    C = params["head_w"].shape[1]
    enc = params["enc"]
    L = enc["wqkv"].shape[0]
    dl = enc["w1"].shape[2]
    hd = heads * dim_head
    N = T + 1

    # Batch blocking: each layer's weights are streamed once per Bb examples.
    # Default Bb = B (best on 1-TC v5e/v6e); on v7x pass batch_block = B // 2 so the
    # "parallel" grid axis can shard across both TensorCores.
    bb = B if batch_block is None else batch_block
    assert B % bb == 0, (B, bb)
    nb = B // bb

    # ---- advisory cost estimate (weight streaming counted once per batch block) ----
    per_layer_flops = (2 * N * D * 3 * hd + 4 * heads * N * N * dim_head
                       + 2 * N * hd * D + 4 * N * D * dl)
    flops = B * (2 * T * token_dim * D + L * per_layer_flops + 2 * D * C)
    transcendentals = B * L * (heads * N * N + 2 * N * dl)
    w_layer_bytes = (D * 3 * hd + hd * D + 2 * D * dl) * 2 + (5 * D + dl) * 4
    const_bytes = (token_dim * D + D * C) * 2 + ((N + 2) * D + C) * 4
    bytes_accessed = (B * T * token_dim * 2
                      + nb * (L * w_layer_bytes + const_bytes)
                      + B * C * 4)

    # ---- VMEM budget: double-buffered layer weights + resident constants + scratch
    #      + working set; clamped to [32 MiB, 64 MiB] (v7x physical VMEM = 64 MiB). ----
    scratch_bytes = bb * N * (D + 4 * hd) * 4
    work_bytes = bb * N * (4 * D + dl + 3 * hd) * 4 + bb * heads * N * N * 4
    vmem_bytes = (2 * w_layer_bytes
                  + 2 * (bb * T * token_dim * 2 + const_bytes)
                  + scratch_bytes + 2 * work_bytes + (8 << 20))
    vmem_limit = int(min(max(vmem_bytes, 32 << 20), 64 << 20))

    kern = functools.partial(_vit_kernel, heads=heads, dim_head=dim_head)
    out = pl.pallas_call(
        kern,
        out_shape=jax.ShapeDtypeStruct((B, 1, C), jnp.float32),
        grid=(nb, L),
        in_specs=[
            pl.BlockSpec((bb, T, token_dim), lambda b, l: (b, 0, 0)),   # patches (bf16)
            pl.BlockSpec((token_dim, D),     lambda b, l: (0, 0)),      # proj_w
            pl.BlockSpec((1, D),             lambda b, l: (0, 0)),      # proj_b
            pl.BlockSpec((1, D),             lambda b, l: (0, 0)),      # cls token
            pl.BlockSpec((N, D),             lambda b, l: (0, 0)),      # pos emb
            pl.BlockSpec((1, D, 3 * hd),     lambda b, l: (l, 0, 0)),   # Wqkv
            pl.BlockSpec((1, hd, D),         lambda b, l: (l, 0, 0)),   # W0
            pl.BlockSpec((1, 1, D),          lambda b, l: (l, 0, 0)),   # g1
            pl.BlockSpec((1, 1, D),          lambda b, l: (l, 0, 0)),   # be1
            pl.BlockSpec((1, D, dl),         lambda b, l: (l, 0, 0)),   # w1
            pl.BlockSpec((1, 1, dl),         lambda b, l: (l, 0, 0)),   # b1
            pl.BlockSpec((1, dl, D),         lambda b, l: (l, 0, 0)),   # w2
            pl.BlockSpec((1, 1, D),          lambda b, l: (l, 0, 0)),   # b2
            pl.BlockSpec((1, 1, D),          lambda b, l: (l, 0, 0)),   # g2
            pl.BlockSpec((1, 1, D),          lambda b, l: (l, 0, 0)),   # be2
            pl.BlockSpec((D, C),             lambda b, l: (0, 0)),      # head_w
            pl.BlockSpec((1, C),             lambda b, l: (0, 0)),      # head_b
        ],
        out_specs=pl.BlockSpec((bb, 1, C), lambda b, l: (b, 0, 0)),
        scratch_shapes=[
            pltpu.VMEM((bb * N, D), jnp.float32),        # residual stream
            pltpu.VMEM((bb * N, 3 * hd), jnp.float32),   # qkv
            pltpu.VMEM((bb * N, hd), jnp.float32),       # attention context
        ],
        compiler_params=pltpu.CompilerParams(
            dimension_semantics=("parallel", "arbitrary"),
            vmem_limit_bytes=vmem_limit,
        ),
        cost_estimate=pl.CostEstimate(
            flops=int(flops),
            transcendentals=int(transcendentals),
            bytes_accessed=int(bytes_accessed),
        ),
    )(patches,
      params["proj_w"].astype(_MM_DTYPE), params["proj_b"].reshape(1, D),
      params["cls"].reshape(1, D), params["pos"][:N],
      enc["wqkv"], enc["w0"], enc["g1"], enc["be1"],
      enc["w1"], enc["b1"], enc["w2"], enc["b2"], enc["g2"], enc["be2"],
      params["head_w"].astype(_MM_DTYPE), params["head_b"].reshape(1, C))
    return out.reshape(B, C)


# --------------------------------------------------------------------------
# Glue (plain JAX): patchify, parameter init / stacking
# --------------------------------------------------------------------------

def patchify(img, p):
    # einops: 'b c (patch_x x) (patch_y y) -> b (x y) (patch_x patch_y c)'
    B, Cc, H, W = img.shape
    xn, yn = H // p, W // p
    t = img.reshape(B, Cc, p, xn, p, yn)         # (b, c, patch_x, x, patch_y, y)
    t = t.transpose(0, 3, 5, 2, 4, 1)            # (b, x, y, patch_x, patch_y, c)
    return t.reshape(B, xn * yn, p * p * Cc)


def _dense(key, fan_in, fan_out):
    return jax.random.normal(key, (fan_in, fan_out), dtype=jnp.float32) * (fan_in ** -0.5)


def init_params(key, *, in_channels, img_dim, patch_dim, dim, blocks, heads,
                dim_head, dim_linear_block, num_classes):
    token_dim = in_channels * patch_dim ** 2
    tokens = (img_dim // patch_dim) ** 2
    keys = jax.random.split(key, 4 + blocks)
    hd = heads * dim_head
    params = {
        "proj_w": _dense(keys[0], token_dim, dim),
        "proj_b": jnp.zeros((dim,), jnp.float32),
        "cls": jax.random.normal(keys[1], (1, 1, dim), dtype=jnp.float32),
        "pos": jax.random.normal(keys[2], (tokens + 1, dim), dtype=jnp.float32),
        "head_w": _dense(keys[3], dim, num_classes),
        "head_b": jnp.zeros((num_classes,), jnp.float32),
        "blocks": [],
    }
    for i in range(blocks):
        bk = jax.random.split(keys[4 + i], 4)
        params["blocks"].append({
            "wqkv": _dense(bk[0], dim, 3 * hd),           # packed [q | k | v], no bias
            "w0": _dense(bk[1], hd, dim),                 # no bias
            "g1": jnp.ones((dim,), jnp.float32), "be1": jnp.zeros((dim,), jnp.float32),
            "w1": _dense(bk[2], dim, dim_linear_block),
            "b1": jnp.zeros((dim_linear_block,), jnp.float32),
            "w2": _dense(bk[3], dim_linear_block, dim),
            "b2": jnp.zeros((dim,), jnp.float32),
            "g2": jnp.ones((dim,), jnp.float32), "be2": jnp.zeros((dim,), jnp.float32),
        })
    return params


def stack_encoder_params(blocks):
    """Stack per-layer params into (L, ...) arrays; matmul weights are bf16."""
    def stk(name):
        return jnp.stack([bp[name] for bp in blocks], axis=0)
    return {
        "wqkv": stk("wqkv").astype(_MM_DTYPE),            # (L, D, 3*hd)
        "w0":   stk("w0").astype(_MM_DTYPE),              # (L, hd, D)
        "w1":   stk("w1").astype(_MM_DTYPE),              # (L, D, dl)
        "w2":   stk("w2").astype(_MM_DTYPE),              # (L, dl, D)
        "g1":  stk("g1")[:, None, :],  "be1": stk("be1")[:, None, :],   # (L, 1, D) f32
        "b1":  stk("b1")[:, None, :],                                   # (L, 1, dl)
        "b2":  stk("b2")[:, None, :],
        "g2":  stk("g2")[:, None, :],  "be2": stk("be2")[:, None, :],
    }


# --------------------------------------------------------------------------
# Pure-JAX f32 reference (same parameterization) for the correctness check
# --------------------------------------------------------------------------

def reference_forward(img, params, *, patch_dim, heads, dim_head):
    patches = patchify(img, patch_dim)
    B, T, _ = patches.shape
    D = params["proj_w"].shape[1]
    hd = heads * dim_head

    x = patches @ params["proj_w"] + params["proj_b"]
    cls = jnp.broadcast_to(params["cls"], (B, 1, D))
    x = jnp.concatenate([cls, x], axis=1) + params["pos"][: T + 1][None]

    def ln(z, g, b):
        mu = z.mean(-1, keepdims=True)
        var = ((z - mu) ** 2).mean(-1, keepdims=True)
        return (z - mu) * jax.lax.rsqrt(var + 1e-5) * g + b

    for bp in params["blocks"]:
        qkv = x @ bp["wqkv"]
        q, k, v = qkv[..., :hd], qkv[..., hd:2 * hd], qkv[..., 2 * hd:]

        def split(z):
            return z.reshape(B, -1, heads, dim_head).transpose(0, 2, 1, 3)

        qh, kh, vh = split(q), split(k), split(v)
        s = jnp.einsum("bhnd,bhmd->bhnm", qh, kh) * dim_head ** -0.5
        p = jax.nn.softmax(s, axis=-1)
        o = jnp.einsum("bhnm,bhmd->bhnd", p, vh)
        o = o.transpose(0, 2, 1, 3).reshape(B, -1, hd)
        mhsa = o @ bp["w0"]
        y = ln(mhsa + x, bp["g1"], bp["be1"])
        h1 = jax.nn.gelu(y @ bp["w1"] + bp["b1"], approximate=False)
        ff = h1 @ bp["w2"] + bp["b2"]
        x = ln(ff + y, bp["g2"], bp["be2"])

    return x[:, 0, :] @ params["head_w"] + params["head_b"]


# --------------------------------------------------------------------------

if __name__ == "__main__":
    # Small shapes consistent with the module: img_dim=16, in_channels=4, patch_dim=8
    # -> tokens = 4, token_dim = 256; dim=32, heads=4 (dim_head=8), 2 blocks, FFN=64.
    B, C_IN, IMG, P = 2, 4, 16, 8
    DIM, HEADS, BLOCKS, DLB, NCLS = 32, 4, 2, 64, 10
    DH = DIM // HEADS

    key = jax.random.PRNGKey(0)
    kimg, kparam = jax.random.split(key)
    img = jax.random.normal(kimg, (B, C_IN, IMG, IMG), dtype=jnp.float32)
    params = init_params(
        kparam, in_channels=C_IN, img_dim=IMG, patch_dim=P, dim=DIM, blocks=BLOCKS,
        heads=HEADS, dim_head=DH, dim_linear_block=DLB, num_classes=NCLS,
    )
    params["enc"] = stack_encoder_params(params["blocks"])

    fwd = jax.jit(functools.partial(
        pallas_vit_forward, patch_dim=P, heads=HEADS, dim_head=DH))
    logits = fwd(img, params)
    jax.block_until_ready(logits)

    ref = reference_forward(img, params, patch_dim=P, heads=HEADS, dim_head=DH)
    assert logits.shape == (B, NCLS), logits.shape
    # bf16 MXU operands / approx reciprocals vs. the pure-f32 reference: relative L2.
    rel = float(jnp.linalg.norm(logits - ref) / jnp.maximum(jnp.linalg.norm(ref), 1e-6))
    assert rel < 5e-2, f"mismatch vs f32 reference: rel L2 err = {rel}"

    print("KERNEL_OK")
</pallas_src>

<mosaic_0001>
module attributes {stable_mosaic.version = 11 : i64} {
  func.func @_vit_kernel(%arg0: i32, %arg1: i32, %arg2: memref<2x4x256xbf16, #tpu.memory_space<vmem>>, %arg3: memref<256x32xbf16, #tpu.memory_space<vmem>>, %arg4: memref<1x32xf32, #tpu.memory_space<vmem>>, %arg5: memref<1x32xf32, #tpu.memory_space<vmem>>, %arg6: memref<5x32xf32, #tpu.memory_space<vmem>>, %arg7: memref<1x32x96xbf16, #tpu.memory_space<vmem>>, %arg8: memref<1x32x32xbf16, #tpu.memory_space<vmem>>, %arg9: memref<1x1x32xf32, #tpu.memory_space<vmem>>, %arg10: memref<1x1x32xf32, #tpu.memory_space<vmem>>, %arg11: memref<1x32x64xbf16, #tpu.memory_space<vmem>>, %arg12: memref<1x1x64xf32, #tpu.memory_space<vmem>>, %arg13: memref<1x64x32xbf16, #tpu.memory_space<vmem>>, %arg14: memref<1x1x32xf32, #tpu.memory_space<vmem>>, %arg15: memref<1x1x32xf32, #tpu.memory_space<vmem>>, %arg16: memref<1x1x32xf32, #tpu.memory_space<vmem>>, %arg17: memref<32x10xbf16, #tpu.memory_space<vmem>>, %arg18: memref<1x10xf32, #tpu.memory_space<vmem>>, %arg19: memref<2x1x10xf32, #tpu.memory_space<vmem>>, %arg20: memref<10x32xf32, #tpu.memory_space<vmem>>, %arg21: memref<10x96xf32, #tpu.memory_space<vmem>>, %arg22: memref<10x32xf32, #tpu.memory_space<vmem>>) attributes {dimension_semantics = [#tpu.dimension_semantics<parallel>, #tpu.dimension_semantics<arbitrary>], iteration_bounds = array<i64: 1, 2>, scalar_prefetch = 0 : i64, scratch_operands = 3 : i64, tpu.core_type = #tpu.core_type<tc>, window_params = [{transform_indices = @transform_0, window_bounds = array<i64: 2, 4, 256>}, {pipeline_mode = #tpu.pipeline_mode<synchronous>, transform_indices = @transform_1, window_bounds = array<i64: 256, 32>}, {pipeline_mode = #tpu.pipeline_mode<synchronous>, transform_indices = @transform_2, window_bounds = array<i64: 1, 32>}, {pipeline_mode = #tpu.pipeline_mode<synchronous>, transform_indices = @transform_3, window_bounds = array<i64: 1, 32>}, {pipeline_mode = #tpu.pipeline_mode<synchronous>, transform_indices = @transform_4, window_bounds = array<i64: 5, 32>}, {transform_indices = @transform_5, window_bounds = array<i64: 1, 32, 96>}, {transform_indices = @transform_6, window_bounds = array<i64: 1, 32, 32>}, {transform_indices = @transform_7, window_bounds = array<i64: 1, 1, 32>}, {transform_indices = @transform_8, window_bounds = array<i64: 1, 1, 32>}, {transform_indices = @transform_9, window_bounds = array<i64: 1, 32, 64>}, {transform_indices = @transform_10, window_bounds = array<i64: 1, 1, 64>}, {transform_indices = @transform_11, window_bounds = array<i64: 1, 64, 32>}, {transform_indices = @transform_12, window_bounds = array<i64: 1, 1, 32>}, {transform_indices = @transform_13, window_bounds = array<i64: 1, 1, 32>}, {transform_indices = @transform_14, window_bounds = array<i64: 1, 1, 32>}, {pipeline_mode = #tpu.pipeline_mode<synchronous>, transform_indices = @transform_15, window_bounds = array<i64: 32, 10>}, {pipeline_mode = #tpu.pipeline_mode<synchronous>, transform_indices = @transform_16, window_bounds = array<i64: 1, 10>}, {transform_indices = @transform_17, window_bounds = array<i64: 2, 1, 10>}]} {
    %c0_i32 = arith.constant 0 : i32
    %0 = arith.cmpi eq, %arg1, %c0_i32 : i32
    %1 = arith.extui %0 : i1 to i32
    %c0_i32_0 = arith.constant 0 : i32
    %2 = arith.cmpi ne, %1, %c0_i32_0 : i32
    scf.if %2 {
      %c0_158 = arith.constant 0 : index
      %c0_159 = arith.constant 0 : index
      %303 = vector.load %arg5[%c0_158, %c0_159] : memref<1x32xf32, #tpu.memory_space<vmem>>, vector<1x32xf32>
      %c0_160 = arith.constant 0 : index
      %c0_161 = arith.constant 0 : index
      %304 = vector.load %arg6[%c0_160, %c0_161] : memref<5x32xf32, #tpu.memory_space<vmem>>, vector<1x32xf32>
      %305 = arith.addf %303, %304 : vector<1x32xf32>
      %c1 = arith.constant 1 : index
      %c0_162 = arith.constant 0 : index
      %306 = vector.load %arg6[%c1, %c0_162] : memref<5x32xf32, #tpu.memory_space<vmem>>, vector<4x32xf32>
      %c0_163 = arith.constant 0 : index
      %c0_164 = arith.constant 0 : index
      %c0_165 = arith.constant 0 : index
      %307 = vector.load %arg2[%c0_163, %c0_164, %c0_165] : memref<2x4x256xbf16, #tpu.memory_space<vmem>>, vector<1x4x256xbf16>
      %308 = vector.shape_cast %307 : vector<1x4x256xbf16> to vector<4x256xbf16>
      %c0_166 = arith.constant 0 : index
      %c0_167 = arith.constant 0 : index
      %309 = vector.load %arg3[%c0_166, %c0_167] : memref<256x32xbf16, #tpu.memory_space<vmem>>, vector<256x32xbf16>
      %cst_168 = arith.constant dense<0.000000e+00> : vector<4x32xf32>
      %310 = tpu.matmul %308, %309, %cst_168 {dimension_numbers = #tpu.dot_dimension_numbers<[1], [0], [0], [1], [0, 0, 1, 1], [], []>} : vector<4x256xbf16>, vector<256x32xbf16>, vector<4x32xf32> -> vector<4x32xf32>
      %c0_169 = arith.constant 0 : index
      %c0_170 = arith.constant 0 : index
      %311 = vector.load %arg4[%c0_169, %c0_170] : memref<1x32xf32, #tpu.memory_space<vmem>>, vector<1x32xf32>
      %312 = vector.broadcast %311 : vector<1x32xf32> to vector<4x32xf32>
      %313 = arith.addf %310, %312 : vector<4x32xf32>
      %c0_171 = arith.constant 0 : index
      %c0_172 = arith.constant 0 : index
      %314 = vector.load %arg20[%c0_171, %c0_172] : memref<10x32xf32, #tpu.memory_space<vmem>>, vector<1x32xf32>
      tpu.vector_store %arg20[%c0_171, %c0_172], %305 {strides = array<i32>} : memref<10x32xf32, #tpu.memory_space<vmem>>, vector<1x32xf32>,
      %315 = arith.addf %313, %306 : vector<4x32xf32>
      %c1_173 = arith.constant 1 : index
      %c0_174 = arith.constant 0 : index
      %316 = vector.load %arg20[%c1_173, %c0_174] : memref<10x32xf32, #tpu.memory_space<vmem>>, vector<4x32xf32>
      tpu.vector_store %arg20[%c1_173, %c0_174], %315 {strides = array<i32>} : memref<10x32xf32, #tpu.memory_space<vmem>>, vector<4x32xf32>,
      %c1_175 = arith.constant 1 : index
      %c0_176 = arith.constant 0 : index
      %c0_177 = arith.constant 0 : index
      %317 = vector.load %arg2[%c1_175, %c0_176, %c0_177] : memref<2x4x256xbf16, #tpu.memory_space<vmem>>, vector<1x4x256xbf16>
      %318 = vector.shape_cast %317 : vector<1x4x256xbf16> to vector<4x256xbf16>
      %c0_178 = arith.constant 0 : index
      %c0_179 = arith.constant 0 : index
      %319 = vector.load %arg3[%c0_178, %c0_179] : memref<256x32xbf16, #tpu.memory_space<vmem>>, vector<256x32xbf16>
      %cst_180 = arith.constant dense<0.000000e+00> : vector<4x32xf32>
      %320 = tpu.matmul %318, %319, %cst_180 {dimension_numbers = #tpu.dot_dimension_numbers<[1], [0], [0], [1], [0, 0, 1, 1], [], []>} : vector<4x256xbf16>, vector<256x32xbf16>, vector<4x32xf32> -> vector<4x32xf32>
      %c0_181 = arith.constant 0 : index
      %c0_182 = arith.constant 0 : index
      %321 = vector.load %arg4[%c0_181, %c0_182] : memref<1x32xf32, #tpu.memory_space<vmem>>, vector<1x32xf32>
      %322 = vector.broadcast %321 : vector<1x32xf32> to vector<4x32xf32>
      %323 = arith.addf %320, %322 : vector<4x32xf32>
      %c5_183 = arith.constant 5 : index
      %c0_184 = arith.constant 0 : index
      %324 = vector.load %arg20[%c5_183, %c0_184] : memref<10x32xf32, #tpu.memory_space<vmem>>, vector<1x32xf32>
      tpu.vector_store %arg20[%c5_183, %c0_184], %305 {strides = array<i32>} : memref<10x32xf32, #tpu.memory_space<vmem>>, vector<1x32xf32>,
      %325 = arith.addf %323, %306 : vector<4x32xf32>
      %c6 = arith.constant 6 : index
      %c0_185 = arith.constant 0 : index
      %326 = vector.load %arg20[%c6, %c0_185] : memref<10x32xf32, #tpu.memory_space<vmem>>, vector<4x32xf32>
      tpu.vector_store %arg20[%c6, %c0_185], %325 {strides = array<i32>} : memref<10x32xf32, #tpu.memory_space<vmem>>, vector<4x32xf32>,
    } else {
    }
    %c0 = arith.constant 0 : index
    %c0_1 = arith.constant 0 : index
    %3 = vector.load %arg20[%c0, %c0_1] : memref<10x32xf32, #tpu.memory_space<vmem>>, vector<10x32xf32>
    %4 = arith.truncf %3 : vector<10x32xf32> to vector<10x32xbf16>
    %c0_2 = arith.constant 0 : index
    %c0_3 = arith.constant 0 : index
    %c0_4 = arith.constant 0 : index
    %5 = vector.load %arg7[%c0_2, %c0_3, %c0_4] : memref<1x32x96xbf16, #tpu.memory_space<vmem>>, vector<1x32x96xbf16>
    %6 = vector.shape_cast %5 : vector<1x32x96xbf16> to vector<32x96xbf16>
    %cst = arith.constant dense<0.000000e+00> : vector<10x96xf32>
    %7 = tpu.matmul %4, %6, %cst {dimension_numbers = #tpu.dot_dimension_numbers<[1], [0], [0], [1], [0, 0, 1, 1], [], []>} : vector<10x32xbf16>, vector<32x96xbf16>, vector<10x96xf32> -> vector<10x96xf32>
    %c0_5 = arith.constant 0 : index
    %c0_6 = arith.constant 0 : index
    %8 = vector.load %arg21[%c0_5, %c0_6] : memref<10x96xf32, #tpu.memory_space<vmem>>, vector<10x96xf32>
    tpu.vector_store %arg21[%c0_5, %c0_6], %7 {strides = array<i32>} : memref<10x96xf32, #tpu.memory_space<vmem>>, vector<10x96xf32>,
    %c0_7 = arith.constant 0 : index
    %c0_8 = arith.constant 0 : index
    %9 = vector.load %arg21[%c0_7, %c0_8] : memref<10x96xf32, #tpu.memory_space<vmem>>, vector<5x8xf32>
    %cst_9 = arith.constant 0.353553385 : f32
    %10 = vector.broadcast %cst_9 : f32 to vector<5x8xf32>
    %11 = arith.mulf %9, %10 : vector<5x8xf32>
    %12 = arith.truncf %11 : vector<5x8xf32> to vector<5x8xbf16>
    %c0_10 = arith.constant 0 : index
    %c32 = arith.constant 32 : index
    %13 = vector.load %arg21[%c0_10, %c32] : memref<10x96xf32, #tpu.memory_space<vmem>>, vector<5x8xf32>
    %14 = arith.truncf %13 : vector<5x8xf32> to vector<5x8xbf16>
    %c0_11 = arith.constant 0 : index
    %c64 = arith.constant 64 : index
    %15 = vector.load %arg21[%c0_11, %c64] : memref<10x96xf32, #tpu.memory_space<vmem>>, vector<5x8xf32>
    %16 = arith.truncf %15 : vector<5x8xf32> to vector<5x8xbf16>
    "tpu.trace_start"() <{level = 10 : i32, message = "nd,md->nm"}> : () -> ()
    %cst_12 = arith.constant dense<0.000000e+00> : vector<5x5xf32>
    %17 = tpu.matmul %12, %14, %cst_12 {dimension_numbers = #tpu.dot_dimension_numbers<[1], [1], [0], [0], [0, 0, 1, 0], [], []>} : vector<5x8xbf16>, vector<5x8xbf16>, vector<5x5xf32> -> vector<5x5xf32>
    "tpu.trace_stop"() : () -> ()
    %cst_13 = arith.constant dense<0xFF800000> : vector<5xf32>
    %18 = vector.multi_reduction <maximumf>, %17, %cst_13 [1] : vector<5x5xf32> to vector<5xf32>
    %19 = vector.shape_cast %18 : vector<5xf32> to vector<5x1xf32>
    %20 = vector.broadcast %19 : vector<5x1xf32> to vector<5x5xf32>
    %21 = arith.subf %17, %20 : vector<5x5xf32>
    %22 = math.exp %21 : vector<5x5xf32>
    %cst_14 = arith.constant dense<0.000000e+00> : vector<5xf32>
    %23 = vector.multi_reduction <add>, %22, %cst_14 [1] : vector<5x5xf32> to vector<5xf32>
    %24 = vector.shape_cast %23 : vector<5xf32> to vector<5x1xf32>
    %25 = tpu.reciprocal %24 {approx = true} : vector<5x1xf32> -> vector<5x1xf32>
    %26 = arith.truncf %22 : vector<5x5xf32> to vector<5x5xbf16>
    "tpu.trace_start"() <{level = 10 : i32, message = "nm,md->nd"}> : () -> ()
    %cst_15 = arith.constant dense<0.000000e+00> : vector<5x8xf32>
    %27 = tpu.matmul %26, %16, %cst_15 {dimension_numbers = #tpu.dot_dimension_numbers<[1], [0], [0], [1], [0, 0, 1, 1], [], []>} : vector<5x5xbf16>, vector<5x8xbf16>, vector<5x8xf32> -> vector<5x8xf32>
    "tpu.trace_stop"() : () -> ()
    %28 = vector.broadcast %25 : vector<5x1xf32> to vector<5x8xf32>
    %29 = arith.mulf %27, %28 : vector<5x8xf32>
    %c0_16 = arith.constant 0 : index
    %c0_17 = arith.constant 0 : index
    %30 = vector.load %arg22[%c0_16, %c0_17] : memref<10x32xf32, #tpu.memory_space<vmem>>, vector<5x8xf32>
    tpu.vector_store %arg22[%c0_16, %c0_17], %29 {strides = array<i32>} : memref<10x32xf32, #tpu.memory_space<vmem>>, vector<5x8xf32>,
    %c0_18 = arith.constant 0 : index
    %c8 = arith.constant 8 : index
    %31 = vector.load %arg21[%c0_18, %c8] : memref<10x96xf32, #tpu.memory_space<vmem>>, vector<5x8xf32>
    %cst_19 = arith.constant 0.353553385 : f32
    %32 = vector.broadcast %cst_19 : f32 to vector<5x8xf32>
    %33 = arith.mulf %31, %32 : vector<5x8xf32>
    %34 = arith.truncf %33 : vector<5x8xf32> to vector<5x8xbf16>
    %c0_20 = arith.constant 0 : index
    %c40 = arith.constant 40 : index
    %35 = vector.load %arg21[%c0_20, %c40] : memref<10x96xf32, #tpu.memory_space<vmem>>, vector<5x8xf32>
    %36 = arith.truncf %35 : vector<5x8xf32> to vector<5x8xbf16>
    %c0_21 = arith.constant 0 : index
    %c72 = arith.constant 72 : index
    %37 = vector.load %arg21[%c0_21, %c72] : memref<10x96xf32, #tpu.memory_space<vmem>>, vector<5x8xf32>
    %38 = arith.truncf %37 : vector<5x8xf32> to vector<5x8xbf16>
    "tpu.trace_start"() <{level = 10 : i32, message = "nd,md->nm"}> : () -> ()
    %cst_22 = arith.constant dense<0.000000e+00> : vector<5x5xf32>
    %39 = tpu.matmul %34, %36, %cst_22 {dimension_numbers = #tpu.dot_dimension_numbers<[1], [1], [0], [0], [0, 0, 1, 0], [], []>} : vector<5x8xbf16>, vector<5x8xbf16>, vector<5x5xf32> -> vector<5x5xf32>
    "tpu.trace_stop"() : () -> ()
    %cst_23 = arith.constant dense<0xFF800000> : vector<5xf32>
    %40 = vector.multi_reduction <maximumf>, %39, %cst_23 [1] : vector<5x5xf32> to vector<5xf32>
    %41 = vector.shape_cast %40 : vector<5xf32> to vector<5x1xf32>
    %42 = vector.broadcast %41 : vector<5x1xf32> to vector<5x5xf32>
    %43 = arith.subf %39, %42 : vector<5x5xf32>
    %44 = math.exp %43 : vector<5x5xf32>
    %cst_24 = arith.constant dense<0.000000e+00> : vector<5xf32>
    %45 = vector.multi_reduction <add>, %44, %cst_24 [1] : vector<5x5xf32> to vector<5xf32>
    %46 = vector.shape_cast %45 : vector<5xf32> to vector<5x1xf32>
    %47 = tpu.reciprocal %46 {approx = true} : vector<5x1xf32> -> vector<5x1xf32>
    %48 = arith.truncf %44 : vector<5x5xf32> to vector<5x5xbf16>
    "tpu.trace_start"() <{level = 10 : i32, message = "nm,md->nd"}> : () -> ()
    %cst_25 = arith.constant dense<0.000000e+00> : vector<5x8xf32>
    %49 = tpu.matmul %48, %38, %cst_25 {dimension_numbers = #tpu.dot_dimension_numbers<[1], [0], [0], [1], [0, 0, 1, 1], [], []>} : vector<5x5xbf16>, vector<5x8xbf16>, vector<5x8xf32> -> vector<5x8xf32>
    "tpu.trace_stop"() : () -> ()
    %50 = vector.broadcast %47 : vector<5x1xf32> to vector<5x8xf32>
    %51 = arith.mulf %49, %50 : vector<5x8xf32>
    %c0_26 = arith.constant 0 : index
    %c8_27 = arith.constant 8 : index
    %52 = vector.load %arg22[%c0_26, %c8_27] : memref<10x32xf32, #tpu.memory_space<vmem>>, vector<5x8xf32>
    tpu.vector_store %arg22[%c0_26, %c8_27], %51 {strides = array<i32>} : memref<10x32xf32, #tpu.memory_space<vmem>>, vector<5x8xf32>,
    %c0_28 = arith.constant 0 : index
    %c16 = arith.constant 16 : index
    %53 = vector.load %arg21[%c0_28, %c16] : memref<10x96xf32, #tpu.memory_space<vmem>>, vector<5x8xf32>
    %cst_29 = arith.constant 0.353553385 : f32
    %54 = vector.broadcast %cst_29 : f32 to vector<5x8xf32>
    %55 = arith.mulf %53, %54 : vector<5x8xf32>
    %56 = arith.truncf %55 : vector<5x8xf32> to vector<5x8xbf16>
    %c0_30 = arith.constant 0 : index
    %c48 = arith.constant 48 : index
    %57 = vector.load %arg21[%c0_30, %c48] : memref<10x96xf32, #tpu.memory_space<vmem>>, vector<5x8xf32>
    %58 = arith.truncf %57 : vector<5x8xf32> to vector<5x8xbf16>
    %c0_31 = arith.constant 0 : index
    %c80 = arith.constant 80 : index
    %59 = vector.load %arg21[%c0_31, %c80] : memref<10x96xf32, #tpu.memory_space<vmem>>, vector<5x8xf32>
    %60 = arith.truncf %59 : vector<5x8xf32> to vector<5x8xbf16>
    "tpu.trace_start"() <{level = 10 : i32, message = "nd,md->nm"}> : () -> ()
    %cst_32 = arith.constant dense<0.000000e+00> : vector<5x5xf32>
    %61 = tpu.matmul %56, %58, %cst_32 {dimension_numbers = #tpu.dot_dimension_numbers<[1], [1], [0], [0], [0, 0, 1, 0], [], []>} : vector<5x8xbf16>, vector<5x8xbf16>, vector<5x5xf32> -> vector<5x5xf32>
    "tpu.trace_stop"() : () -> ()
    %cst_33 = arith.constant dense<0xFF800000> : vector<5xf32>
    %62 = vector.multi_reduction <maximumf>, %61, %cst_33 [1] : vector<5x5xf32> to vector<5xf32>
    %63 = vector.shape_cast %62 : vector<5xf32> to vector<5x1xf32>
    %64 = vector.broadcast %63 : vector<5x1xf32> to vector<5x5xf32>
    %65 = arith.subf %61, %64 : vector<5x5xf32>
    %66 = math.exp %65 : vector<5x5xf32>
    %cst_34 = arith.constant dense<0.000000e+00> : vector<5xf32>
    %67 = vector.multi_reduction <add>, %66, %cst_34 [1] : vector<5x5xf32> to vector<5xf32>
    %68 = vector.shape_cast %67 : vector<5xf32> to vector<5x1xf32>
    %69 = tpu.reciprocal %68 {approx = true} : vector<5x1xf32> -> vector<5x1xf32>
    %70 = arith.truncf %66 : vector<5x5xf32> to vector<5x5xbf16>
    "tpu.trace_start"() <{level = 10 : i32, message = "nm,md->nd"}> : () -> ()
    %cst_35 = arith.constant dense<0.000000e+00> : vector<5x8xf32>
    %71 = tpu.matmul %70, %60, %cst_35 {dimension_numbers = #tpu.dot_dimension_numbers<[1], [0], [0], [1], [0, 0, 1, 1], [], []>} : vector<5x5xbf16>, vector<5x8xbf16>, vector<5x8xf32> -> vector<5x8xf32>
    "tpu.trace_stop"() : () -> ()
    %72 = vector.broadcast %69 : vector<5x1xf32> to vector<5x8xf32>
    %73 = arith.mulf %71, %72 : vector<5x8xf32>
    %c0_36 = arith.constant 0 : index
    %c16_37 = arith.constant 16 : index
    %74 = vector.load %arg22[%c0_36, %c16_37] : memref<10x32xf32, #tpu.memory_space<vmem>>, vector<5x8xf32>
    tpu.vector_store %arg22[%c0_36, %c16_37], %73 {strides = array<i32>} : memref<10x32xf32, #tpu.memory_space<vmem>>, vector<5x8xf32>,
    %c0_38 = arith.constant 0 : index
    %c24 = arith.constant 24 : index
    %75 = vector.load %arg21[%c0_38, %c24] : memref<10x96xf32, #tpu.memory_space<vmem>>, vector<5x8xf32>
    %cst_39 = arith.constant 0.353553385 : f32
    %76 = vector.broadcast %cst_39 : f32 to vector<5x8xf32>
    %77 = arith.mulf %75, %76 : vector<5x8xf32>
    %78 = arith.truncf %77 : vector<5x8xf32> to vector<5x8xbf16>
    %c0_40 = arith.constant 0 : index
    %c56 = arith.constant 56 : index
    %79 = vector.load %arg21[%c0_40, %c56] : memref<10x96xf32, #tpu.memory_space<vmem>>, vector<5x8xf32>
    %80 = arith.truncf %79 : vector<5x8xf32> to vector<5x8xbf16>
    %c0_41 = arith.constant 0 : index
    %c88 = arith.constant 88 : index
    %81 = vector.load %arg21[%c0_41, %c88] : memref<10x96xf32, #tpu.memory_space<vmem>>, vector<5x8xf32>
    %82 = arith.truncf %81 : vector<5x8xf32> to vector<5x8xbf16>
    "tpu.trace_start"() <{level = 10 : i32, message = "nd,md->nm"}> : () -> ()
    %cst_42 = arith.constant dense<0.000000e+00> : vector<5x5xf32>
    %83 = tpu.matmul %78, %80, %cst_42 {dimension_numbers = #tpu.dot_dimension_numbers<[1], [1], [0], [0], [0, 0, 1, 0], [], []>} : vector<5x8xbf16>, vector<5x8xbf16>, vector<5x5xf32> -> vector<5x5xf32>
    "tpu.trace_stop"() : () -> ()
    %cst_43 = arith.constant dense<0xFF800000> : vector<5xf32>
    %84 = vector.multi_reduction <maximumf>, %83, %cst_43 [1] : vector<5x5xf32> to vector<5xf32>
    %85 = vector.shape_cast %84 : vector<5xf32> to vector<5x1xf32>
    %86 = vector.broadcast %85 : vector<5x1xf32> to vector<5x5xf32>
    %87 = arith.subf %83, %86 : vector<5x5xf32>
    %88 = math.exp %87 : vector<5x5xf32>
    %cst_44 = arith.constant dense<0.000000e+00> : vector<5xf32>
    %89 = vector.multi_reduction <add>, %88, %cst_44 [1] : vector<5x5xf32> to vector<5xf32>
    %90 = vector.shape_cast %89 : vector<5xf32> to vector<5x1xf32>
    %91 = tpu.reciprocal %90 {approx = true} : vector<5x1xf32> -> vector<5x1xf32>
    %92 = arith.truncf %88 : vector<5x5xf32> to vector<5x5xbf16>
    "tpu.trace_start"() <{level = 10 : i32, message = "nm,md->nd"}> : () -> ()
    %cst_45 = arith.constant dense<0.000000e+00> : vector<5x8xf32>
    %93 = tpu.matmul %92, %82, %cst_45 {dimension_numbers = #tpu.dot_dimension_numbers<[1], [0], [0], [1], [0, 0, 1, 1], [], []>} : vector<5x5xbf16>, vector<5x8xbf16>, vector<5x8xf32> -> vector<5x8xf32>
    "tpu.trace_stop"() : () -> ()
    %94 = vector.broadcast %91 : vector<5x1xf32> to vector<5x8xf32>
    %95 = arith.mulf %93, %94 : vector<5x8xf32>
    %c0_46 = arith.constant 0 : index
    %c24_47 = arith.constant 24 : index
    %96 = vector.load %arg22[%c0_46, %c24_47] : memref<10x32xf32, #tpu.memory_space<vmem>>, vector<5x8xf32>
    tpu.vector_store %arg22[%c0_46, %c24_47], %95 {strides = array<i32>} : memref<10x32xf32, #tpu.memory_space<vmem>>, vector<5x8xf32>,
    %c5 = arith.constant 5 : index
    %c0_48 = arith.constant 0 : index
    %97 = vector.load %arg21[%c5, %c0_48] : memref<10x96xf32, #tpu.memory_space<vmem>>, vector<5x8xf32>
    %cst_49 = arith.constant 0.353553385 : f32
    %98 = vector.broadcast %cst_49 : f32 to vector<5x8xf32>
    %99 = arith.mulf %97, %98 : vector<5x8xf32>
    %100 = arith.truncf %99 : vector<5x8xf32> to vector<5x8xbf16>
    %c5_50 = arith.constant 5 : index
    %c32_51 = arith.constant 32 : index
    %101 = vector.load %arg21[%c5_50, %c32_51] : memref<10x96xf32, #tpu.memory_space<vmem>>, vector<5x8xf32>
    %102 = arith.truncf %101 : vector<5x8xf32> to vector<5x8xbf16>
    %c5_52 = arith.constant 5 : index
    %c64_53 = arith.constant 64 : index
    %103 = vector.load %arg21[%c5_52, %c64_53] : memref<10x96xf32, #tpu.memory_space<vmem>>, vector<5x8xf32>
    %104 = arith.truncf %103 : vector<5x8xf32> to vector<5x8xbf16>
    "tpu.trace_start"() <{level = 10 : i32, message = "nd,md->nm"}> : () -> ()
    %cst_54 = arith.constant dense<0.000000e+00> : vector<5x5xf32>
    %105 = tpu.matmul %100, %102, %cst_54 {dimension_numbers = #tpu.dot_dimension_numbers<[1], [1], [0], [0], [0, 0, 1, 0], [], []>} : vector<5x8xbf16>, vector<5x8xbf16>, vector<5x5xf32> -> vector<5x5xf32>
    "tpu.trace_stop"() : () -> ()
    %cst_55 = arith.constant dense<0xFF800000> : vector<5xf32>
    %106 = vector.multi_reduction <maximumf>, %105, %cst_55 [1] : vector<5x5xf32> to vector<5xf32>
    %107 = vector.shape_cast %106 : vector<5xf32> to vector<5x1xf32>
    %108 = vector.broadcast %107 : vector<5x1xf32> to vector<5x5xf32>
    %109 = arith.subf %105, %108 : vector<5x5xf32>
    %110 = math.exp %109 : vector<5x5xf32>
    %cst_56 = arith.constant dense<0.000000e+00> : vector<5xf32>
    %111 = vector.multi_reduction <add>, %110, %cst_56 [1] : vector<5x5xf32> to vector<5xf32>
    %112 = vector.shape_cast %111 : vector<5xf32> to vector<5x1xf32>
    %113 = tpu.reciprocal %112 {approx = true} : vector<5x1xf32> -> vector<5x1xf32>
    %114 = arith.truncf %110 : vector<5x5xf32> to vector<5x5xbf16>
    "tpu.trace_start"() <{level = 10 : i32, message = "nm,md->nd"}> : () -> ()
    %cst_57 = arith.constant dense<0.000000e+00> : vector<5x8xf32>
    %115 = tpu.matmul %114, %104, %cst_57 {dimension_numbers = #tpu.dot_dimension_numbers<[1], [0], [0], [1], [0, 0, 1, 1], [], []>} : vector<5x5xbf16>, vector<5x8xbf16>, vector<5x8xf32> -> vector<5x8xf32>
    "tpu.trace_stop"() : () -> ()
    %116 = vector.broadcast %113 : vector<5x1xf32> to vector<5x8xf32>
    %117 = arith.mulf %115, %116 : vector<5x8xf32>
    %c5_58 = arith.constant 5 : index
    %c0_59 = arith.constant 0 : index
    %118 = vector.load %arg22[%c5_58, %c0_59] : memref<10x32xf32, #tpu.memory_space<vmem>>, vector<5x8xf32>
    tpu.vector_store %arg22[%c5_58, %c0_59], %117 {strides = array<i32>} : memref<10x32xf32, #tpu.memory_space<vmem>>, vector<5x8xf32>,
    %c5_60 = arith.constant 5 : index
    %c8_61 = arith.constant 8 : index
    %119 = vector.load %arg21[%c5_60, %c8_61] : memref<10x96xf32, #tpu.memory_space<vmem>>, vector<5x8xf32>
    %cst_62 = arith.constant 0.353553385 : f32
    %120 = vector.broadcast %cst_62 : f32 to vector<5x8xf32>
    %121 = arith.mulf %119, %120 : vector<5x8xf32>
    %122 = arith.truncf %121 : vector<5x8xf32> to vector<5x8xbf16>
    %c5_63 = arith.constant 5 : index
    %c40_64 = arith.constant 40 : index
    %123 = vector.load %arg21[%c5_63, %c40_64] : memref<10x96xf32, #tpu.memory_space<vmem>>, vector<5x8xf32>
    %124 = arith.truncf %123 : vector<5x8xf32> to vector<5x8xbf16>
    %c5_65 = arith.constant 5 : index
    %c72_66 = arith.constant 72 : index
    %125 = vector.load %arg21[%c5_65, %c72_66] : memref<10x96xf32, #tpu.memory_space<vmem>>, vector<5x8xf32>
    %126 = arith.truncf %125 : vector<5x8xf32> to vector<5x8xbf16>
    "tpu.trace_start"() <{level = 10 : i32, message = "nd,md->nm"}> : () -> ()
    %cst_67 = arith.constant dense<0.000000e+00> : vector<5x5xf32>
    %127 = tpu.matmul %122, %124, %cst_67 {dimension_numbers = #tpu.dot_dimension_numbers<[1], [1], [0], [0], [0, 0, 1, 0], [], []>} : vector<5x8xbf16>, vector<5x8xbf16>, vector<5x5xf32> -> vector<5x5xf32>
    "tpu.trace_stop"() : () -> ()
    %cst_68 = arith.constant dense<0xFF800000> : vector<5xf32>
    %128 = vector.multi_reduction <maximumf>, %127, %cst_68 [1] : vector<5x5xf32> to vector<5xf32>
    %129 = vector.shape_cast %128 : vector<5xf32> to vector<5x1xf32>
    %130 = vector.broadcast %129 : vector<5x1xf32> to vector<5x5xf32>
    %131 = arith.subf %127, %130 : vector<5x5xf32>
    %132 = math.exp %131 : vector<5x5xf32>
    %cst_69 = arith.constant dense<0.000000e+00> : vector<5xf32>
    %133 = vector.multi_reduction <add>, %132, %cst_69 [1] : vector<5x5xf32> to vector<5xf32>
    %134 = vector.shape_cast %133 : vector<5xf32> to vector<5x1xf32>
    %135 = tpu.reciprocal %134 {approx = true} : vector<5x1xf32> -> vector<5x1xf32>
    %136 = arith.truncf %132 : vector<5x5xf32> to vector<5x5xbf16>
    "tpu.trace_start"() <{level = 10 : i32, message = "nm,md->nd"}> : () -> ()
    %cst_70 = arith.constant dense<0.000000e+00> : vector<5x8xf32>
    %137 = tpu.matmul %136, %126, %cst_70 {dimension_numbers = #tpu.dot_dimension_numbers<[1], [0], [0], [1], [0, 0, 1, 1], [], []>} : vector<5x5xbf16>, vector<5x8xbf16>, vector<5x8xf32> -> vector<5x8xf32>
    "tpu.trace_stop"() : () -> ()
    %138 = vector.broadcast %135 : vector<5x1xf32> to vector<5x8xf32>
    %139 = arith.mulf %137, %138 : vector<5x8xf32>
    %c5_71 = arith.constant 5 : index
    %c8_72 = arith.constant 8 : index
    %140 = vector.load %arg22[%c5_71, %c8_72] : memref<10x32xf32, #tpu.memory_space<vmem>>, vector<5x8xf32>
    tpu.vector_store %arg22[%c5_71, %c8_72], %139 {strides = array<i32>} : memref<10x32xf32, #tpu.memory_space<vmem>>, vector<5x8xf32>,
    %c5_73 = arith.constant 5 : index
    %c16_74 = arith.constant 16 : index
    %141 = vector.load %arg21[%c5_73, %c16_74] : memref<10x96xf32, #tpu.memory_space<vmem>>, vector<5x8xf32>
    %cst_75 = arith.constant 0.353553385 : f32
    %142 = vector.broadcast %cst_75 : f32 to vector<5x8xf32>
    %143 = arith.mulf %141, %142 : vector<5x8xf32>
    %144 = arith.truncf %143 : vector<5x8xf32> to vector<5x8xbf16>
    %c5_76 = arith.constant 5 : index
    %c48_77 = arith.constant 48 : index
    %145 = vector.load %arg21[%c5_76, %c48_77] : memref<10x96xf32, #tpu.memory_space<vmem>>, vector<5x8xf32>
    %146 = arith.truncf %145 : vector<5x8xf32> to vector<5x8xbf16>
    %c5_78 = arith.constant 5 : index
    %c80_79 = arith.constant 80 : index
    %147 = vector.load %arg21[%c5_78, %c80_79] : memref<10x96xf32, #tpu.memory_space<vmem>>, vector<5x8xf32>
    %148 = arith.truncf %147 : vector<5x8xf32> to vector<5x8xbf16>
    "tpu.trace_start"() <{level = 10 : i32, message = "nd,md->nm"}> : () -> ()
    %cst_80 = arith.constant dense<0.000000e+00> : vector<5x5xf32>
    %149 = tpu.matmul %144, %146, %cst_80 {dimension_numbers = #tpu.dot_dimension_numbers<[1], [1], [0], [0], [0, 0, 1, 0], [], []>} : vector<5x8xbf16>, vector<5x8xbf16>, vector<5x5xf32> -> vector<5x5xf32>
    "tpu.trace_stop"() : () -> ()
    %cst_81 = arith.constant dense<0xFF800000> : vector<5xf32>
    %150 = vector.multi_reduction <maximumf>, %149, %cst_81 [1] : vector<5x5xf32> to vector<5xf32>
    %151 = vector.shape_cast %150 : vector<5xf32> to vector<5x1xf32>
    %152 = vector.broadcast %151 : vector<5x1xf32> to vector<5x5xf32>
    %153 = arith.subf %149, %152 : vector<5x5xf32>
    %154 = math.exp %153 : vector<5x5xf32>
    %cst_82 = arith.constant dense<0.000000e+00> : vector<5xf32>
    %155 = vector.multi_reduction <add>, %154, %cst_82 [1] : vector<5x5xf32> to vector<5xf32>
    %156 = vector.shape_cast %155 : vector<5xf32> to vector<5x1xf32>
    %157 = tpu.reciprocal %156 {approx = true} : vector<5x1xf32> -> vector<5x1xf32>
    %158 = arith.truncf %154 : vector<5x5xf32> to vector<5x5xbf16>
    "tpu.trace_start"() <{level = 10 : i32, message = "nm,md->nd"}> : () -> ()
    %cst_83 = arith.constant dense<0.000000e+00> : vector<5x8xf32>
    %159 = tpu.matmul %158, %148, %cst_83 {dimension_numbers = #tpu.dot_dimension_numbers<[1], [0], [0], [1], [0, 0, 1, 1], [], []>} : vector<5x5xbf16>, vector<5x8xbf16>, vector<5x8xf32> -> vector<5x8xf32>
    "tpu.trace_stop"() : () -> ()
    %160 = vector.broadcast %157 : vector<5x1xf32> to vector<5x8xf32>
    %161 = arith.mulf %159, %160 : vector<5x8xf32>
    %c5_84 = arith.constant 5 : index
    %c16_85 = arith.constant 16 : index
    %162 = vector.load %arg22[%c5_84, %c16_85] : memref<10x32xf32, #tpu.memory_space<vmem>>, vector<5x8xf32>
    tpu.vector_store %arg22[%c5_84, %c16_85], %161 {strides = array<i32>} : memref<10x32xf32, #tpu.memory_space<vmem>>, vector<5x8xf32>,
    %c5_86 = arith.constant 5 : index
    %c24_87 = arith.constant 24 : index
    %163 = vector.load %arg21[%c5_86, %c24_87] : memref<10x96xf32, #tpu.memory_space<vmem>>, vector<5x8xf32>
    %cst_88 = arith.constant 0.353553385 : f32
    %164 = vector.broadcast %cst_88 : f32 to vector<5x8xf32>
    %165 = arith.mulf %163, %164 : vector<5x8xf32>
    %166 = arith.truncf %165 : vector<5x8xf32> to vector<5x8xbf16>
    %c5_89 = arith.constant 5 : index
    %c56_90 = arith.constant 56 : index
    %167 = vector.load %arg21[%c5_89, %c56_90] : memref<10x96xf32, #tpu.memory_space<vmem>>, vector<5x8xf32>
    %168 = arith.truncf %167 : vector<5x8xf32> to vector<5x8xbf16>
    %c5_91 = arith.constant 5 : index
    %c88_92 = arith.constant 88 : index
    %169 = vector.load %arg21[%c5_91, %c88_92] : memref<10x96xf32, #tpu.memory_space<vmem>>, vector<5x8xf32>
    %170 = arith.truncf %169 : vector<5x8xf32> to vector<5x8xbf16>
    "tpu.trace_start"() <{level = 10 : i32, message = "nd,md->nm"}> : () -> ()
    %cst_93 = arith.constant dense<0.000000e+00> : vector<5x5xf32>
    %171 = tpu.matmul %166, %168, %cst_93 {dimension_numbers = #tpu.dot_dimension_numbers<[1], [1], [0], [0], [0, 0, 1, 0], [], []>} : vector<5x8xbf16>, vector<5x8xbf16>, vector<5x5xf32> -> vector<5x5xf32>
    "tpu.trace_stop"() : () -> ()
    %cst_94 = arith.constant dense<0xFF800000> : vector<5xf32>
    %172 = vector.multi_reduction <maximumf>, %171, %cst_94 [1] : vector<5x5xf32> to vector<5xf32>
    %173 = vector.shape_cast %172 : vector<5xf32> to vector<5x1xf32>
    %174 = vector.broadcast %173 : vector<5x1xf32> to vector<5x5xf32>
    %175 = arith.subf %171, %174 : vector<5x5xf32>
    %176 = math.exp %175 : vector<5x5xf32>
    %cst_95 = arith.constant dense<0.000000e+00> : vector<5xf32>
    %177 = vector.multi_reduction <add>, %176, %cst_95 [1] : vector<5x5xf32> to vector<5xf32>
    %178 = vector.shape_cast %177 : vector<5xf32> to vector<5x1xf32>
    %179 = tpu.reciprocal %178 {approx = true} : vector<5x1xf32> -> vector<5x1xf32>
    %180 = arith.truncf %176 : vector<5x5xf32> to vector<5x5xbf16>
    "tpu.trace_start"() <{level = 10 : i32, message = "nm,md->nd"}> : () -> ()
    %cst_96 = arith.constant dense<0.000000e+00> : vector<5x8xf32>
    %181 = tpu.matmul %180, %170, %cst_96 {dimension_numbers = #tpu.dot_dimension_numbers<[1], [0], [0], [1], [0, 0, 1, 1], [], []>} : vector<5x5xbf16>, vector<5x8xbf16>, vector<5x8xf32> -> vector<5x8xf32>
    "tpu.trace_stop"() : () -> ()
    %182 = vector.broadcast %179 : vector<5x1xf32> to vector<5x8xf32>
    %183 = arith.mulf %181, %182 : vector<5x8xf32>
    %c5_97 = arith.constant 5 : index
    %c24_98 = arith.constant 24 : index
    %184 = vector.load %arg22[%c5_97, %c24_98] : memref<10x32xf32, #tpu.memory_space<vmem>>, vector<5x8xf32>
    tpu.vector_store %arg22[%c5_97, %c24_98], %183 {strides = array<i32>} : memref<10x32xf32, #tpu.memory_space<vmem>>, vector<5x8xf32>,
    %c0_99 = arith.constant 0 : index
    %c0_100 = arith.constant 0 : index
    %185 = vector.load %arg22[%c0_99, %c0_100] : memref<10x32xf32, #tpu.memory_space<vmem>>, vector<10x32xf32>
    %186 = arith.truncf %185 : vector<10x32xf32> to vector<10x32xbf16>
    %c0_101 = arith.constant 0 : index
    %c0_102 = arith.constant 0 : index
    %c0_103 = arith.constant 0 : index
    %187 = vector.load %arg8[%c0_101, %c0_102, %c0_103] : memref<1x32x32xbf16, #tpu.memory_space<vmem>>, vector<1x32x32xbf16>
    %188 = vector.shape_cast %187 : vector<1x32x32xbf16> to vector<32x32xbf16>
    %cst_104 = arith.constant dense<0.000000e+00> : vector<10x32xf32>
    %189 = tpu.matmul %186, %188, %cst_104 {dimension_numbers = #tpu.dot_dimension_numbers<[1], [0], [0], [1], [0, 0, 1, 1], [], []>} : vector<10x32xbf16>, vector<32x32xbf16>, vector<10x32xf32> -> vector<10x32xf32>
    %190 = arith.addf %189, %3 : vector<10x32xf32>
    %c0_105 = arith.constant 0 : index
    %c0_106 = arith.constant 0 : index
    %c0_107 = arith.constant 0 : index
    %191 = vector.load %arg9[%c0_105, %c0_106, %c0_107] : memref<1x1x32xf32, #tpu.memory_space<vmem>>, vector<1x1x32xf32>
    %192 = vector.shape_cast %191 : vector<1x1x32xf32> to vector<1x32xf32>
    %c0_108 = arith.constant 0 : index
    %c0_109 = arith.constant 0 : index
    %c0_110 = arith.constant 0 : index
    %193 = vector.load %arg10[%c0_108, %c0_109, %c0_110] : memref<1x1x32xf32, #tpu.memory_space<vmem>>, vector<1x1x32xf32>
    %194 = vector.shape_cast %193 : vector<1x1x32xf32> to vector<1x32xf32>
    %cst_111 = arith.constant dense<0.000000e+00> : vector<10xf32>
    %195 = vector.multi_reduction <add>, %190, %cst_111 [1] : vector<10x32xf32> to vector<10xf32>
    %196 = vector.shape_cast %195 : vector<10xf32> to vector<10x1xf32>
    %cst_112 = arith.constant 3.200000e+01 : f32
    %197 = vector.broadcast %cst_112 : f32 to vector<10x1xf32>
    %198 = arith.divf %196, %197 : vector<10x1xf32>
    %199 = vector.broadcast %198 : vector<10x1xf32> to vector<10x32xf32>
    %200 = arith.subf %190, %199 : vector<10x32xf32>
    %201 = arith.mulf %200, %200 : vector<10x32xf32>
    %cst_113 = arith.constant dense<0.000000e+00> : vector<10xf32>
    %202 = vector.multi_reduction <add>, %201, %cst_113 [1] : vector<10x32xf32> to vector<10xf32>
    %203 = vector.shape_cast %202 : vector<10xf32> to vector<10x1xf32>
    %cst_114 = arith.constant 3.200000e+01 : f32
    %204 = vector.broadcast %cst_114 : f32 to vector<10x1xf32>
    %205 = arith.divf %203, %204 : vector<10x1xf32>
    %206 = vector.broadcast %198 : vector<10x1xf32> to vector<10x32xf32>
    %207 = arith.subf %190, %206 : vector<10x32xf32>
    %cst_115 = arith.constant 9.99999974E-6 : f32
    %208 = vector.broadcast %cst_115 : f32 to vector<10x1xf32>
    %209 = arith.addf %205, %208 : vector<10x1xf32>
    %210 = math.rsqrt %209 : vector<10x1xf32>
    %211 = vector.broadcast %210 : vector<10x1xf32> to vector<10x32xf32>
    %212 = arith.mulf %207, %211 : vector<10x32xf32>
    %213 = vector.broadcast %192 : vector<1x32xf32> to vector<10x32xf32>
    %214 = arith.mulf %212, %213 : vector<10x32xf32>
    %215 = vector.broadcast %194 : vector<1x32xf32> to vector<10x32xf32>
    %216 = arith.addf %214, %215 : vector<10x32xf32>
    %217 = arith.truncf %216 : vector<10x32xf32> to vector<10x32xbf16>
    %c0_116 = arith.constant 0 : index
    %c0_117 = arith.constant 0 : index
    %c0_118 = arith.constant 0 : index
    %218 = vector.load %arg11[%c0_116, %c0_117, %c0_118] : memref<1x32x64xbf16, #tpu.memory_space<vmem>>, vector<1x32x64xbf16>
    %219 = vector.shape_cast %218 : vector<1x32x64xbf16> to vector<32x64xbf16>
    %cst_119 = arith.constant dense<0.000000e+00> : vector<10x64xf32>
    %220 = tpu.matmul %217, %219, %cst_119 {dimension_numbers = #tpu.dot_dimension_numbers<[1], [0], [0], [1], [0, 0, 1, 1], [], []>} : vector<10x32xbf16>, vector<32x64xbf16>, vector<10x64xf32> -> vector<10x64xf32>
    %c0_120 = arith.constant 0 : index
    %c0_121 = arith.constant 0 : index
    %c0_122 = arith.constant 0 : index
    %221 = vector.load %arg12[%c0_120, %c0_121, %c0_122] : memref<1x1x64xf32, #tpu.memory_space<vmem>>, vector<1x1x64xf32>
    %222 = vector.shape_cast %221 : vector<1x1x64xf32> to vector<1x64xf32>
    %223 = vector.broadcast %222 : vector<1x64xf32> to vector<10x64xf32>
    %224 = arith.addf %220, %223 : vector<10x64xf32>
    %cst_123 = arith.constant 5.000000e-01 : f32
    %225 = vector.broadcast %cst_123 : f32 to vector<10x64xf32>
    %226 = arith.mulf %225, %224 : vector<10x64xf32>
    %cst_124 = arith.constant 0.707106769 : f32
    %227 = vector.broadcast %cst_124 : f32 to vector<10x64xf32>
    %228 = arith.mulf %224, %227 : vector<10x64xf32>
    %229 = math.absf %228 : vector<10x64xf32>
    %cst_125 = arith.constant 0.327591091 : f32
    %230 = vector.broadcast %cst_125 : f32 to vector<10x64xf32>
    %231 = arith.mulf %230, %229 : vector<10x64xf32>
    %cst_126 = arith.constant 1.000000e+00 : f32
    %232 = vector.broadcast %cst_126 : f32 to vector<10x64xf32>
    %233 = arith.addf %232, %231 : vector<10x64xf32>
    %234 = tpu.reciprocal %233 {approx = true} : vector<10x64xf32> -> vector<10x64xf32>
    %cst_127 = arith.constant 1.06140542 : f32
    %235 = vector.broadcast %cst_127 : f32 to vector<10x64xf32>
    %236 = arith.mulf %235, %234 : vector<10x64xf32>
    %cst_128 = arith.constant -1.45315206 : f32
    %237 = vector.broadcast %cst_128 : f32 to vector<10x64xf32>
    %238 = arith.addf %236, %237 : vector<10x64xf32>
    %239 = arith.mulf %238, %234 : vector<10x64xf32>
    %cst_129 = arith.constant 1.42141378 : f32
    %240 = vector.broadcast %cst_129 : f32 to vector<10x64xf32>
    %241 = arith.addf %239, %240 : vector<10x64xf32>
    %242 = arith.mulf %241, %234 : vector<10x64xf32>
    %cst_130 = arith.constant -0.284496725 : f32
    %243 = vector.broadcast %cst_130 : f32 to vector<10x64xf32>
    %244 = arith.addf %242, %243 : vector<10x64xf32>
    %245 = arith.mulf %244, %234 : vector<10x64xf32>
    %cst_131 = arith.constant 0.254829586 : f32
    %246 = vector.broadcast %cst_131 : f32 to vector<10x64xf32>
    %247 = arith.addf %245, %246 : vector<10x64xf32>
    %248 = arith.mulf %247, %234 : vector<10x64xf32>
    %cst_132 = arith.constant 0.000000e+00 : f32
    %249 = vector.broadcast %cst_132 : f32 to vector<10x64xf32>
    %250 = arith.subf %249, %229 : vector<10x64xf32>
    %251 = arith.mulf %250, %229 : vector<10x64xf32>
    %252 = math.exp %251 : vector<10x64xf32>
    %253 = arith.mulf %248, %252 : vector<10x64xf32>
    %cst_133 = arith.constant 1.000000e+00 : f32
    %254 = vector.broadcast %cst_133 : f32 to vector<10x64xf32>
    %255 = arith.subf %254, %253 : vector<10x64xf32>
    %cst_134 = arith.constant 0.000000e+00 : f32
    %256 = vector.broadcast %cst_134 : f32 to vector<10x64xf32>
    %257 = arith.cmpf olt, %228, %256 : vector<10x64xf32>
    %cst_135 = arith.constant 0.000000e+00 : f32
    %258 = vector.broadcast %cst_135 : f32 to vector<10x64xf32>
    %259 = arith.subf %258, %255 : vector<10x64xf32>
    %260 = arith.select %257, %259, %255 : vector<10x64xi1>, vector<10x64xf32>
    %cst_136 = arith.constant 1.000000e+00 : f32
    %261 = vector.broadcast %cst_136 : f32 to vector<10x64xf32>
    %262 = arith.addf %261, %260 : vector<10x64xf32>
    %263 = arith.mulf %226, %262 : vector<10x64xf32>
    %264 = arith.truncf %263 : vector<10x64xf32> to vector<10x64xbf16>
    %c0_137 = arith.constant 0 : index
    %c0_138 = arith.constant 0 : index
    %c0_139 = arith.constant 0 : index
    %265 = vector.load %arg13[%c0_137, %c0_138, %c0_139] : memref<1x64x32xbf16, #tpu.memory_space<vmem>>, vector<1x64x32xbf16>
    %266 = vector.shape_cast %265 : vector<1x64x32xbf16> to vector<64x32xbf16>
    %cst_140 = arith.constant dense<0.000000e+00> : vector<10x32xf32>
    %267 = tpu.matmul %264, %266, %cst_140 {dimension_numbers = #tpu.dot_dimension_numbers<[1], [0], [0], [1], [0, 0, 1, 1], [], []>} : vector<10x64xbf16>, vector<64x32xbf16>, vector<10x32xf32> -> vector<10x32xf32>
    %c0_141 = arith.constant 0 : index
    %c0_142 = arith.constant 0 : index
    %c0_143 = arith.constant 0 : index
    %268 = vector.load %arg14[%c0_141, %c0_142, %c0_143] : memref<1x1x32xf32, #tpu.memory_space<vmem>>, vector<1x1x32xf32>
    %269 = vector.shape_cast %268 : vector<1x1x32xf32> to vector<1x32xf32>
    %270 = vector.broadcast %269 : vector<1x32xf32> to vector<10x32xf32>
    %271 = arith.addf %267, %270 : vector<10x32xf32>
    %272 = arith.addf %271, %216 : vector<10x32xf32>
    %c0_144 = arith.constant 0 : index
    %c0_145 = arith.constant 0 : index
    %c0_146 = arith.constant 0 : index
    %273 = vector.load %arg15[%c0_144, %c0_145, %c0_146] : memref<1x1x32xf32, #tpu.memory_space<vmem>>, vector<1x1x32xf32>
    %274 = vector.shape_cast %273 : vector<1x1x32xf32> to vector<1x32xf32>
    %c0_147 = arith.constant 0 : index
    %c0_148 = arith.constant 0 : index
    %c0_149 = arith.constant 0 : index
    %275 = vector.load %arg16[%c0_147, %c0_148, %c0_149] : memref<1x1x32xf32, #tpu.memory_space<vmem>>, vector<1x1x32xf32>
    %276 = vector.shape_cast %275 : vector<1x1x32xf32> to vector<1x32xf32>
    %cst_150 = arith.constant dense<0.000000e+00> : vector<10xf32>
    %277 = vector.multi_reduction <add>, %272, %cst_150 [1] : vector<10x32xf32> to vector<10xf32>
    %278 = vector.shape_cast %277 : vector<10xf32> to vector<10x1xf32>
    %cst_151 = arith.constant 3.200000e+01 : f32
    %279 = vector.broadcast %cst_151 : f32 to vector<10x1xf32>
    %280 = arith.divf %278, %279 : vector<10x1xf32>
    %281 = vector.broadcast %280 : vector<10x1xf32> to vector<10x32xf32>
    %282 = arith.subf %272, %281 : vector<10x32xf32>
    %283 = arith.mulf %282, %282 : vector<10x32xf32>
    %cst_152 = arith.constant dense<0.000000e+00> : vector<10xf32>
    %284 = vector.multi_reduction <add>, %283, %cst_152 [1] : vector<10x32xf32> to vector<10xf32>
    %285 = vector.shape_cast %284 : vector<10xf32> to vector<10x1xf32>
    %cst_153 = arith.constant 3.200000e+01 : f32
    %286 = vector.broadcast %cst_153 : f32 to vector<10x1xf32>
    %287 = arith.divf %285, %286 : vector<10x1xf32>
    %288 = vector.broadcast %280 : vector<10x1xf32> to vector<10x32xf32>
    %289 = arith.subf %272, %288 : vector<10x32xf32>
    %cst_154 = arith.constant 9.99999974E-6 : f32
    %290 = vector.broadcast %cst_154 : f32 to vector<10x1xf32>
    %291 = arith.addf %287, %290 : vector<10x1xf32>
    %292 = math.rsqrt %291 : vector<10x1xf32>
    %293 = vector.broadcast %292 : vector<10x1xf32> to vector<10x32xf32>
    %294 = arith.mulf %289, %293 : vector<10x32xf32>
    %295 = vector.broadcast %274 : vector<1x32xf32> to vector<10x32xf32>
    %296 = arith.mulf %294, %295 : vector<10x32xf32>
    %297 = vector.broadcast %276 : vector<1x32xf32> to vector<10x32xf32>
    %298 = arith.addf %296, %297 : vector<10x32xf32>
    %c0_155 = arith.constant 0 : index
    %c0_156 = arith.constant 0 : index
    %299 = vector.load %arg20[%c0_155, %c0_156] : memref<10x32xf32, #tpu.memory_space<vmem>>, vector<10x32xf32>
    tpu.vector_store %arg20[%c0_155, %c0_156], %298 {strides = array<i32>} : memref<10x32xf32, #tpu.memory_space<vmem>>, vector<10x32xf32>,
    %c1_i32 = arith.constant 1 : i32
    %300 = arith.cmpi eq, %arg1, %c1_i32 : i32
    %301 = arith.extui %300 : i1 to i32
    %c0_i32_157 = arith.constant 0 : i32
    %302 = arith.cmpi ne, %301, %c0_i32_157 : i32
    scf.if %302 {
      %c0_158 = arith.constant 0 : index
      %c0_159 = arith.constant 0 : index
      %303 = vector.load %arg20[%c0_158, %c0_159] : memref<10x32xf32, #tpu.memory_space<vmem>>, vector<1x32xf32>
      %304 = arith.truncf %303 : vector<1x32xf32> to vector<1x32xbf16>
      %c0_160 = arith.constant 0 : index
      %c0_161 = arith.constant 0 : index
      %305 = vector.load %arg17[%c0_160, %c0_161] : memref<32x10xbf16, #tpu.memory_space<vmem>>, vector<32x10xbf16>
      %cst_162 = arith.constant dense<0.000000e+00> : vector<1x10xf32>
      %306 = tpu.matmul %304, %305, %cst_162 {dimension_numbers = #tpu.dot_dimension_numbers<[1], [0], [0], [1], [0, 0, 1, 1], [], []>} : vector<1x32xbf16>, vector<32x10xbf16>, vector<1x10xf32> -> vector<1x10xf32>
      %c0_163 = arith.constant 0 : index
      %c0_164 = arith.constant 0 : index
      %307 = vector.load %arg18[%c0_163, %c0_164] : memref<1x10xf32, #tpu.memory_space<vmem>>, vector<1x10xf32>
      %308 = arith.addf %306, %307 : vector<1x10xf32>
      %c0_165 = arith.constant 0 : index
      %c0_166 = arith.constant 0 : index
      %c0_167 = arith.constant 0 : index
      %309 = vector.load %arg19[%c0_165, %c0_166, %c0_167] : memref<2x1x10xf32, #tpu.memory_space<vmem>>, vector<1x1x10xf32>
      %310 = vector.shape_cast %309 : vector<1x1x10xf32> to vector<1x10xf32>
      %311 = vector.shape_cast %308 : vector<1x10xf32> to vector<1x1x10xf32>
      tpu.vector_store %arg19[%c0_165, %c0_166, %c0_167], %311 {strides = array<i32>} : memref<2x1x10xf32, #tpu.memory_space<vmem>>, vector<1x1x10xf32>,
      %c5_168 = arith.constant 5 : index
      %c0_169 = arith.constant 0 : index
      %312 = vector.load %arg20[%c5_168, %c0_169] : memref<10x32xf32, #tpu.memory_space<vmem>>, vector<1x32xf32>
      %313 = arith.truncf %312 : vector<1x32xf32> to vector<1x32xbf16>
      %c0_170 = arith.constant 0 : index
      %c0_171 = arith.constant 0 : index
      %314 = vector.load %arg17[%c0_170, %c0_171] : memref<32x10xbf16, #tpu.memory_space<vmem>>, vector<32x10xbf16>
      %cst_172 = arith.constant dense<0.000000e+00> : vector<1x10xf32>
      %315 = tpu.matmul %313, %314, %cst_172 {dimension_numbers = #tpu.dot_dimension_numbers<[1], [0], [0], [1], [0, 0, 1, 1], [], []>} : vector<1x32xbf16>, vector<32x10xbf16>, vector<1x10xf32> -> vector<1x10xf32>
      %c0_173 = arith.constant 0 : index
      %c0_174 = arith.constant 0 : index
      %316 = vector.load %arg18[%c0_173, %c0_174] : memref<1x10xf32, #tpu.memory_space<vmem>>, vector<1x10xf32>
      %317 = arith.addf %315, %316 : vector<1x10xf32>
      %c1 = arith.constant 1 : index
      %c0_175 = arith.constant 0 : index
      %c0_176 = arith.constant 0 : index
      %318 = vector.load %arg19[%c1, %c0_175, %c0_176] : memref<2x1x10xf32, #tpu.memory_space<vmem>>, vector<1x1x10xf32>
      %319 = vector.shape_cast %318 : vector<1x1x10xf32> to vector<1x10xf32>
      %320 = vector.shape_cast %317 : vector<1x10xf32> to vector<1x1x10xf32>
      tpu.vector_store %arg19[%c1, %c0_175, %c0_176], %320 {strides = array<i32>} : memref<2x1x10xf32, #tpu.memory_space<vmem>>, vector<1x1x10xf32>,
    } else {
    }
    return
  }
  func.func @transform_0(%arg0: i32, %arg1: i32) -> (i32, i32, i32) {
    %c0_i32 = arith.constant 0 : i32
    %c0_i32_0 = arith.constant 0 : i32
    %c0_i32_1 = arith.constant 0 : i32
    return %arg0, %c0_i32, %c0_i32_0 : i32, i32, i32
  }
  func.func @transform_1(%arg0: i32, %arg1: i32) -> (i32, i32) {
    %c0_i32 = arith.constant 0 : i32
    %c0_i32_0 = arith.constant 0 : i32
    %c0_i32_1 = arith.constant 0 : i32
    return %c0_i32, %c0_i32_0 : i32, i32
  }
  func.func @transform_2(%arg0: i32, %arg1: i32) -> (i32, i32) {
    %c0_i32 = arith.constant 0 : i32
    %c0_i32_0 = arith.constant 0 : i32
    %c0_i32_1 = arith.constant 0 : i32
    return %c0_i32, %c0_i32_0 : i32, i32
  }
  func.func @transform_3(%arg0: i32, %arg1: i32) -> (i32, i32) {
    %c0_i32 = arith.constant 0 : i32
    %c0_i32_0 = arith.constant 0 : i32
    %c0_i32_1 = arith.constant 0 : i32
    return %c0_i32, %c0_i32_0 : i32, i32
  }
  func.func @transform_4(%arg0: i32, %arg1: i32) -> (i32, i32) {
    %c0_i32 = arith.constant 0 : i32
    %c0_i32_0 = arith.constant 0 : i32
    %c0_i32_1 = arith.constant 0 : i32
    return %c0_i32, %c0_i32_0 : i32, i32
  }
  func.func @transform_5(%arg0: i32, %arg1: i32) -> (i32, i32, i32) {
    %c0_i32 = arith.constant 0 : i32
    %c0_i32_0 = arith.constant 0 : i32
    %c0_i32_1 = arith.constant 0 : i32
    return %arg1, %c0_i32, %c0_i32_0 : i32, i32, i32
  }
  func.func @transform_6(%arg0: i32, %arg1: i32) -> (i32, i32, i32) {
    %c0_i32 = arith.constant 0 : i32
    %c0_i32_0 = arith.constant 0 : i32
    %c0_i32_1 = arith.constant 0 : i32
    return %arg1, %c0_i32, %c0_i32_0 : i32, i32, i32
  }
  func.func @transform_7(%arg0: i32, %arg1: i32) -> (i32, i32, i32) {
    %c0_i32 = arith.constant 0 : i32
    %c0_i32_0 = arith.constant 0 : i32
    %c0_i32_1 = arith.constant 0 : i32
    return %arg1, %c0_i32, %c0_i32_0 : i32, i32, i32
  }
  func.func @transform_8(%arg0: i32, %arg1: i32) -> (i32, i32, i32) {
    %c0_i32 = arith.constant 0 : i32
    %c0_i32_0 = arith.constant 0 : i32
    %c0_i32_1 = arith.constant 0 : i32
    return %arg1, %c0_i32, %c0_i32_0 : i32, i32, i32
  }
  func.func @transform_9(%arg0: i32, %arg1: i32) -> (i32, i32, i32) {
    %c0_i32 = arith.constant 0 : i32
    %c0_i32_0 = arith.constant 0 : i32
    %c0_i32_1 = arith.constant 0 : i32
    return %arg1, %c0_i32, %c0_i32_0 : i32, i32, i32
  }
  func.func @transform_10(%arg0: i32, %arg1: i32) -> (i32, i32, i32) {
    %c0_i32 = arith.constant 0 : i32
    %c0_i32_0 = arith.constant 0 : i32
    %c0_i32_1 = arith.constant 0 : i32
    return %arg1, %c0_i32, %c0_i32_0 : i32, i32, i32
  }
  func.func @transform_11(%arg0: i32, %arg1: i32) -> (i32, i32, i32) {
    %c0_i32 = arith.constant 0 : i32
    %c0_i32_0 = arith.constant 0 : i32
    %c0_i32_1 = arith.constant 0 : i32
    return %arg1, %c0_i32, %c0_i32_0 : i32, i32, i32
  }
  func.func @transform_12(%arg0: i32, %arg1: i32) -> (i32, i32, i32) {
    %c0_i32 = arith.constant 0 : i32
    %c0_i32_0 = arith.constant 0 : i32
    %c0_i32_1 = arith.constant 0 : i32
    return %arg1, %c0_i32, %c0_i32_0 : i32, i32, i32
  }
  func.func @transform_13(%arg0: i32, %arg1: i32) -> (i32, i32, i32) {
    %c0_i32 = arith.constant 0 : i32
    %c0_i32_0 = arith.constant 0 : i32
    %c0_i32_1 = arith.constant 0 : i32
    return %arg1, %c0_i32, %c0_i32_0 : i32, i32, i32
  }
  func.func @transform_14(%arg0: i32, %arg1: i32) -> (i32, i32, i32) {
    %c0_i32 = arith.constant 0 : i32
    %c0_i32_0 = arith.constant 0 : i32
    %c0_i32_1 = arith.constant 0 : i32
    return %arg1, %c0_i32, %c0_i32_0 : i32, i32, i32
  }
  func.func @transform_15(%arg0: i32, %arg1: i32) -> (i32, i32) {
    %c0_i32 = arith.constant 0 : i32
    %c0_i32_0 = arith.constant 0 : i32
    %c0_i32_1 = arith.constant 0 : i32
    return %c0_i32, %c0_i32_0 : i32, i32
  }
  func.func @transform_16(%arg0: i32, %arg1: i32) -> (i32, i32) {
    %c0_i32 = arith.constant 0 : i32
    %c0_i32_0 = arith.constant 0 : i32
    %c0_i32_1 = arith.constant 0 : i32
    return %c0_i32, %c0_i32_0 : i32, i32
  }
  func.func @transform_17(%arg0: i32, %arg1: i32) -> (i32, i32, i32) {
    %c0_i32 = arith.constant 0 : i32
    %c0_i32_0 = arith.constant 0 : i32
    %c0_i32_1 = arith.constant 0 : i32
    return %arg0, %c0_i32, %c0_i32_0 : i32, i32, i32
  }
}

</mosaic_0001>

<llo_original>
// kernel: pallas_vit_forward.1
$region0: #{pallas_vit_forward.1}
  #allocation0 [shape = 'u32[]', space=smem, size = 0x4, offset = 0x4, fixed_abs, tag = 'smem constant byte address 0x4 - core index']
  #allocation1 [shape = 'u32[72,128]{1,0:T(1,128)}', space=vmem, size = 0x9000, scoped, tag = 'internal scratch']
  #allocation2 [shape = 'f32[10,32]{1,0:T(8,128)}', space=vmem, size = 0x2000, scoped, tag = 'scratch operand']
  #allocation3 [shape = 'f32[10,96]{1,0:T(8,128)}', space=vmem, size = 0x2000, scoped, tag = 'scratch operand']
  #allocation4 [shape = 'f32[10,32]{1,0:T(8,128)}', space=vmem, size = 0x2000, scoped, tag = 'scratch operand']
  %s0 = inlined_call_operand.vmem [shape: bf16[2,4,256], index: 0, kind: input, shape index: {}]
  %s1 = inlined_call_operand.vmem [shape: bf16[256,32], index: 1, kind: input, shape index: {}]
  %s2 = inlined_call_operand.vmem [shape: f32[1,32], index: 2, kind: input, shape index: {}]
  %s3 = inlined_call_operand.vmem [shape: f32[1,32], index: 3, kind: input, shape index: {}]
  %s4 = inlined_call_operand.vmem [shape: f32[5,32], index: 4, kind: input, shape index: {}]
  %s5 = inlined_call_operand.vmem [shape: bf16[2,32,96], index: 5, kind: input, shape index: {}]
  %s6 = inlined_call_operand.vmem [shape: bf16[2,32,32], index: 6, kind: input, shape index: {}]
  %s7 = inlined_call_operand.vmem [shape: f32[2,1,32], index: 7, kind: input, shape index: {}]
  %s8 = inlined_call_operand.vmem [shape: f32[2,1,32], index: 8, kind: input, shape index: {}]
  %s9 = inlined_call_operand.vmem [shape: bf16[2,32,64], index: 9, kind: input, shape index: {}]
  %s10 = inlined_call_operand.vmem [shape: f32[2,1,64], index: 10, kind: input, shape index: {}]
  %s11 = inlined_call_operand.vmem [shape: bf16[2,64,32], index: 11, kind: input, shape index: {}]
  %s12 = inlined_call_operand.vmem [shape: f32[2,1,32], index: 12, kind: input, shape index: {}]
  %s13 = inlined_call_operand.vmem [shape: f32[2,1,32], index: 13, kind: input, shape index: {}]
  %s14 = inlined_call_operand.vmem [shape: f32[2,1,32], index: 14, kind: input, shape index: {}]
  %s15 = inlined_call_operand.vmem [shape: bf16[32,10], index: 15, kind: input, shape index: {}]
  %s16 = inlined_call_operand.vmem [shape: f32[1,10], index: 16, kind: input, shape index: {}]
  %s17 = inlined_call_operand.hbm [shape: f32[2,1,10], index: 17, kind: output, shape index: {}]
  %s18 = sld [smem:[#allocation0]]
  $region109: #{pallas_vit_forward.1} parent=0
    _
  %s20 = ssub.s32 1, %s18
  %s21 = scalar_select 0, %s20, %s18
  $region1: #{pallas_vit_forward.1} parent=0
    #allocation5 [shape = 'u8[1024]{0}', space=vmem, size = 0x400, scoped, tag = 'output window, operand 0, single buffered']
    #allocation6 [shape = 's32[2]{0}', space=sflag, size = 0x8, scoped, tag = 'scoped memory for pallas_vit_forward.1']
    %22 = vsyncpa [#allocation6], 0
    loop: start=0, step=1, limit=4
    $region2: #{pallas_vit_forward.1} parent=1 // loop_pre_header
      _
    $region3: #{pallas_vit_forward.1} parent=1 // loop_header
      %s24 = sphi 0, %s28
      %p25 = scmp.ge.s32.totalorder %s24, 4
      %s31 = sphi 0, %s43
      %s32 = sphi 0, %s39
      %s33 = sphi 0, %s31
      %s34 = sphi 0, %s32
      %s35 = sphi 0, %s33
      %s36 = sphi 0, %s34
      %s46 = sphi 0, %s48
      %s49 = sphi 0, %s46
      %s50 = sphi 0, %s49
      %s66 = sphi 0, %s50
      %s70 = sphi 0, %s70
      %s72 = sphi 0, %s70
      %s73 = sphi 0, %s72
      %s87 = sphi 0, %s73
      %s91 = sphi 0, %s91
      %s93 = sphi 0, %s91
      %s94 = sphi 0, %s93
      %s108 = sphi 0, %s94
      %s112 = sphi 0, %s112
      %s114 = sphi 0, %s112
      %s115 = sphi 0, %s114
      %s129 = sphi 0, %s115
      %s133 = sphi 0, %s133
      %s135 = sphi 0, %s133
      %s136 = sphi 0, %s135
      %s150 = sphi 0, %s136
      %s156 = sphi 0, %s158
      %s159 = sphi 0, %s156
      %s160 = sphi 0, %s159
      %s176 = sphi 0, %s160
      %s182 = sphi 0, %s184
      %s185 = sphi 0, %s182
      %s186 = sphi 0, %s185
      %s202 = sphi 0, %s186
      %s208 = sphi 0, %s210
      %s211 = sphi 0, %s208
      %s212 = sphi 0, %s211
      %s228 = sphi 0, %s212
      %s234 = sphi 0, %s236
      %s237 = sphi 0, %s234
      %s238 = sphi 0, %s237
      %s254 = sphi 0, %s238
      %s260 = sphi 0, %s262
      %s263 = sphi 0, %s260
      %s264 = sphi 0, %s263
      %s280 = sphi 0, %s264
      %s286 = sphi 0, %s288
      %s289 = sphi 0, %s286
      %s290 = sphi 0, %s289
      %s306 = sphi 0, %s290
      %s312 = sphi 0, %s314
      %s315 = sphi 0, %s312
      %s316 = sphi 0, %s315
      %s332 = sphi 0, %s316
      %s338 = sphi 0, %s340
      %s341 = sphi 0, %s338
      %s342 = sphi 0, %s341
      %s358 = sphi 0, %s342
      %s364 = sphi 0, %s366
      %s367 = sphi 0, %s364
      %s368 = sphi 0, %s367
      %s384 = sphi 0, %s368
      %s390 = sphi 0, %s392
      %s393 = sphi 0, %s390
      %s394 = sphi 0, %s393
      %s410 = sphi 0, %s394
      %s414 = sphi 0, %s414
      %s416 = sphi 0, %s414
      %s417 = sphi 0, %s416
      %s431 = sphi 0, %s417
      %s435 = sphi 0, %s435
      %s437 = sphi 0, %s435
      %s438 = sphi 0, %s437
      %s452 = sphi 0, %s438
      %s458 = sphi 0, %s460
      %s461 = sphi 0, %s458
      %s462 = sphi 0, %s461
      %s478 = sphi 0, %s462
    $region4: #{pallas_vit_forward.1} parent=1 // loop_header_branch
      %27 = sbr.rel (%p25) target = $region8
    $region5: #{pallas_vit_forward.1} parent=1 // loop_body
      %s29 = ssub.s32 %s24, 1
      %s30 = ssub.s32 %s24, 2
      %s37 = sadd.s32 1, %s32
      %p38 = scmp.ge.s32.totalorder %s37, 2
      %s39 = scalar_select %p38, 0, %s37
      %s40 = sadd.s32 1, %s31
      %s41 = scalar_select %p38, %s40, %s31
      %p42 = scmp.ge.s32.totalorder %s41, 1
      %s43 = scalar_select %p42, 0, %s41
      %s44 = ssub.s32 %s31, %s43
      %p45 = scmp.eq.s32.totalorder %s44, 0
      %s47 = sadd.s32 %s46, 1
      %s48 = scalar_select %p45, %s46, %s47
      %p51 = pneg %p45
      %p52 = scmp.eq.s32.totalorder %s24, 1
      %p53 = por %p51, %p52
      %p54 = scmp.ne.s32.totalorder %s46, %s49
      %p55 = scmp.eq.s32.totalorder %s24, 0
      %p56 = por %p54, %p55
      %p57 = scmp.ne.s32.totalorder %s46, %s49
      %p58 = scmp.eq.s32.totalorder %s29, 1
      %p59 = por %p57, %p58
      %p60 = scmp.ne.s32.totalorder %s49, %s50
      %p61 = scmp.eq.s32.totalorder %s29, 0
      %p62 = por %p60, %p61
      %p63 = scmp.ne.s32.totalorder %s49, %s50
      %p64 = scmp.eq.s32.totalorder %s30, 1
      %p65 = por %p63, %p64
      %p67 = scmp.ne.s32.totalorder %s50, %s66
      %p68 = scmp.eq.s32.totalorder %s30, 0
      %p69 = por %p67, %p68
      %s71 = sadd.s32 %s70, 1
      %p74 = scmp.eq.s32.totalorder %s24, 1
      %p75 = scmp.ne.s32.totalorder %s70, %s72
      %p76 = scmp.eq.s32.totalorder %s24, 0
      %p77 = por %p75, %p76
      %p78 = scmp.ne.s32.totalorder %s70, %s72
      %p79 = scmp.eq.s32.totalorder %s29, 1
      %p80 = por %p78, %p79
      %p81 = scmp.ne.s32.totalorder %s72, %s73
      %p82 = scmp.eq.s32.totalorder %s29, 0
      %p83 = por %p81, %p82
      %p84 = scmp.ne.s32.totalorder %s72, %s73
      %p85 = scmp.eq.s32.totalorder %s30, 1
      %p86 = por %p84, %p85
      %p88 = scmp.ne.s32.totalorder %s73, %s87
      %p89 = scmp.eq.s32.totalorder %s30, 0
      %p90 = por %p88, %p89
      %s92 = sadd.s32 %s91, 1
      %p95 = scmp.eq.s32.totalorder %s24, 1
      %p96 = scmp.ne.s32.totalorder %s91, %s93
      %p97 = scmp.eq.s32.totalorder %s24, 0
      %p98 = por %p96, %p97
      %p99 = scmp.ne.s32.totalorder %s91, %s93
      %p100 = scmp.eq.s32.totalorder %s29, 1
      %p101 = por %p99, %p100
      %p102 = scmp.ne.s32.totalorder %s93, %s94
      %p103 = scmp.eq.s32.totalorder %s29, 0
      %p104 = por %p102, %p103
      %p105 = scmp.ne.s32.totalorder %s93, %s94
      %p106 = scmp.eq.s32.totalorder %s30, 1
      %p107 = por %p105, %p106
      %p109 = scmp.ne.s32.totalorder %s94, %s108
      %p110 = scmp.eq.s32.totalorder %s30, 0
      %p111 = por %p109, %p110
      %s113 = sadd.s32 %s112, 1
      %p116 = scmp.eq.s32.totalorder %s24, 1
      %p117 = scmp.ne.s32.totalorder %s112, %s114
      %p118 = scmp.eq.s32.totalorder %s24, 0
      %p119 = por %p117, %p118
      %p120 = scmp.ne.s32.totalorder %s112, %s114
      %p121 = scmp.eq.s32.totalorder %s29, 1
      %p122 = por %p120, %p121
      %p123 = scmp.ne.s32.totalorder %s114, %s115
      %p124 = scmp.eq.s32.totalorder %s29, 0
      %p125 = por %p123, %p124
      %p126 = scmp.ne.s32.totalorder %s114, %s115
      %p127 = scmp.eq.s32.totalorder %s30, 1
      %p128 = por %p126, %p127
      %p130 = scmp.ne.s32.totalorder %s115, %s129
      %p131 = scmp.eq.s32.totalorder %s30, 0
      %p132 = por %p130, %p131
      %s134 = sadd.s32 %s133, 1
      %p137 = scmp.eq.s32.totalorder %s24, 1
      %p138 = scmp.ne.s32.totalorder %s133, %s135
      %p139 = scmp.eq.s32.totalorder %s24, 0
      %p140 = por %p138, %p139
      %p141 = scmp.ne.s32.totalorder %s133, %s135
      %p142 = scmp.eq.s32.totalorder %s29, 1
      %p143 = por %p141, %p142
      %p144 = scmp.ne.s32.totalorder %s135, %s136
      %p145 = scmp.eq.s32.totalorder %s29, 0
      %p146 = por %p144, %p145
      %p147 = scmp.ne.s32.totalorder %s135, %s136
      %p148 = scmp.eq.s32.totalorder %s30, 1
      %p149 = por %p147, %p148
      %p151 = scmp.ne.s32.totalorder %s136, %s150
      %p152 = scmp.eq.s32.totalorder %s30, 0
      %p153 = por %p151, %p152
      %s154 = ssub.s32 %s32, %s39
      %p155 = scmp.eq.s32.totalorder %s154, 0
      %s157 = sadd.s32 %s156, 1
      %s158 = scalar_select %p155, %s156, %s157
      %p161 = pneg %p155
      %p162 = scmp.eq.s32.totalorder %s24, 1
      %p163 = por %p161, %p162
      %p164 = scmp.ne.s32.totalorder %s156, %s159
      %p165 = scmp.eq.s32.totalorder %s24, 0
      %p166 = por %p164, %p165
      %p167 = scmp.ne.s32.totalorder %s156, %s159
      %p168 = scmp.eq.s32.totalorder %s29, 1
      %p169 = por %p167, %p168
      %p170 = scmp.ne.s32.totalorder %s159, %s160
      %p171 = scmp.eq.s32.totalorder %s29, 0
      %p172 = por %p170, %p171
      %p173 = scmp.ne.s32.totalorder %s159, %s160
      %p174 = scmp.eq.s32.totalorder %s30, 1
      %p175 = por %p173, %p174
      %p177 = scmp.ne.s32.totalorder %s160, %s176
      %p178 = scmp.eq.s32.totalorder %s30, 0
      %p179 = por %p177, %p178
      %s180 = ssub.s32 %s32, %s39
      %p181 = scmp.eq.s32.totalorder %s180, 0
      %s183 = sadd.s32 %s182, 1
      %s184 = scalar_select %p181, %s182, %s183
      %p187 = pneg %p181
      %p188 = scmp.eq.s32.totalorder %s24, 1
      %p189 = por %p187, %p188
      %p190 = scmp.ne.s32.totalorder %s182, %s185
      %p191 = scmp.eq.s32.totalorder %s24, 0
      %p192 = por %p190, %p191
      %p193 = scmp.ne.s32.totalorder %s182, %s185
      %p194 = scmp.eq.s32.totalorder %s29, 1
      %p195 = por %p193, %p194
      %p196 = scmp.ne.s32.totalorder %s185, %s186
      %p197 = scmp.eq.s32.totalorder %s29, 0
      %p198 = por %p196, %p197
      %p199 = scmp.ne.s32.totalorder %s185, %s186
      %p200 = scmp.eq.s32.totalorder %s30, 1
      %p201 = por %p199, %p200
      %p203 = scmp.ne.s32.totalorder %s186, %s202
      %p204 = scmp.eq.s32.totalorder %s30, 0
      %p205 = por %p203, %p204
      %s206 = ssub.s32 %s32, %s39
      %p207 = scmp.eq.s32.totalorder %s206, 0
      %s209 = sadd.s32 %s208, 1
      %s210 = scalar_select %p207, %s208, %s209
      %p213 = pneg %p207
      %p214 = scmp.eq.s32.totalorder %s24, 1
      %p215 = por %p213, %p214
      %p216 = scmp.ne.s32.totalorder %s208, %s211
      %p217 = scmp.eq.s32.totalorder %s24, 0
      %p218 = por %p216, %p217
      %p219 = scmp.ne.s32.totalorder %s208, %s211
      %p220 = scmp.eq.s32.totalorder %s29, 1
      %p221 = por %p219, %p220
      %p222 = scmp.ne.s32.totalorder %s211, %s212
      %p223 = scmp.eq.s32.totalorder %s29, 0
      %p224 = por %p222, %p223
      %p225 = scmp.ne.s32.totalorder %s211, %s212
      %p226 = scmp.eq.s32.totalorder %s30, 1
      %p227 = por %p225, %p226
      %p229 = scmp.ne.s32.totalorder %s212, %s228
      %p230 = scmp.eq.s32.totalorder %s30, 0
      %p231 = por %p229, %p230
      %s232 = ssub.s32 %s32, %s39
      %p233 = scmp.eq.s32.totalorder %s232, 0
      %s235 = sadd.s32 %s234, 1
      %s236 = scalar_select %p233, %s234, %s235
      %p239 = pneg %p233
      %p240 = scmp.eq.s32.totalorder %s24, 1
      %p241 = por %p239, %p240
      %p242 = scmp.ne.s32.totalorder %s234, %s237
      %p243 = scmp.eq.s32.totalorder %s24, 0
      %p244 = por %p242, %p243
      %p245 = scmp.ne.s32.totalorder %s234, %s237
      %p246 = scmp.eq.s32.totalorder %s29, 1
      %p247 = por %p245, %p246
      %p248 = scmp.ne.s32.totalorder %s237, %s238
      %p249 = scmp.eq.s32.totalorder %s29, 0
      %p250 = por %p248, %p249
      %p251 = scmp.ne.s32.totalorder %s237, %s238
      %p252 = scmp.eq.s32.totalorder %s30, 1
      %p253 = por %p251, %p252
      %p255 = scmp.ne.s32.totalorder %s238, %s254
      %p256 = scmp.eq.s32.totalorder %s30, 0
      %p257 = por %p255, %p256
      %s258 = ssub.s32 %s32, %s39
      %p259 = scmp.eq.s32.totalorder %s258, 0
      %s261 = sadd.s32 %s260, 1
      %s262 = scalar_select %p259, %s260, %s261
      %p265 = pneg %p259
      %p266 = scmp.eq.s32.totalorder %s24, 1
      %p267 = por %p265, %p266
      %p268 = scmp.ne.s32.totalorder %s260, %s263
      %p269 = scmp.eq.s32.totalorder %s24, 0
      %p270 = por %p268, %p269
      %p271 = scmp.ne.s32.totalorder %s260, %s263
      %p272 = scmp.eq.s32.totalorder %s29, 1
      %p273 = por %p271, %p272
      %p274 = scmp.ne.s32.totalorder %s263, %s264
      %p275 = scmp.eq.s32.totalorder %s29, 0
      %p276 = por %p274, %p275
      %p277 = scmp.ne.s32.totalorder %s263, %s264
      %p278 = scmp.eq.s32.totalorder %s30, 1
      %p279 = por %p277, %p278
      %p281 = scmp.ne.s32.totalorder %s264, %s280
      %p282 = scmp.eq.s32.totalorder %s30, 0
      %p283 = por %p281, %p282
      %s284 = ssub.s32 %s32, %s39
      %p285 = scmp.eq.s32.totalorder %s284, 0
      %s287 = sadd.s32 %s286, 1
      %s288 = scalar_select %p285, %s286, %s287
      %p291 = pneg %p285
      %p292 = scmp.eq.s32.totalorder %s24, 1
      %p293 = por %p291, %p292
      %p294 = scmp.ne.s32.totalorder %s286, %s289
      %p295 = scmp.eq.s32.totalorder %s24, 0
      %p296 = por %p294, %p295
      %p297 = scmp.ne.s32.totalorder %s286, %s289
      %p298 = scmp.eq.s32.totalorder %s29, 1
      %p299 = por %p297, %p298
      %p300 = scmp.ne.s32.totalorder %s289, %s290
      %p301 = scmp.eq.s32.totalorder %s29, 0
      %p302 = por %p300, %p301
      %p303 = scmp.ne.s32.totalorder %s289, %s290
      %p304 = scmp.eq.s32.totalorder %s30, 1
      %p305 = por %p303, %p304
      %p307 = scmp.ne.s32.totalorder %s290, %s306
      %p308 = scmp.eq.s32.totalorder %s30, 0
      %p309 = por %p307, %p308
      %s310 = ssub.s32 %s32, %s39
      %p311 = scmp.eq.s32.totalorder %s310, 0
      %s313 = sadd.s32 %s312, 1
      %s314 = scalar_select %p311, %s312, %s313
      %p317 = pneg %p311
      %p318 = scmp.eq.s32.totalorder %s24, 1
      %p319 = por %p317, %p318
      %p320 = scmp.ne.s32.totalorder %s312, %s315
      %p321 = scmp.eq.s32.totalorder %s24, 0
      %p322 = por %p320, %p321
      %p323 = scmp.ne.s32.totalorder %s312, %s315
      %p324 = scmp.eq.s32.totalorder %s29, 1
      %p325 = por %p323, %p324
      %p326 = scmp.ne.s32.totalorder %s315, %s316
      %p327 = scmp.eq.s32.totalorder %s29, 0
      %p328 = por %p326, %p327
      %p329 = scmp.ne.s32.totalorder %s315, %s316
      %p330 = scmp.eq.s32.totalorder %s30, 1
      %p331 = por %p329, %p330
      %p333 = scmp.ne.s32.totalorder %s316, %s332
      %p334 = scmp.eq.s32.totalorder %s30, 0
      %p335 = por %p333, %p334
      %s336 = ssub.s32 %s32, %s39
      %p337 = scmp.eq.s32.totalorder %s336, 0
      %s339 = sadd.s32 %s338, 1
      %s340 = scalar_select %p337, %s338, %s339
      %p343 = pneg %p337
      %p344 = scmp.eq.s32.totalorder %s24, 1
      %p345 = por %p343, %p344
      %p346 = scmp.ne.s32.totalorder %s338, %s341
      %p347 = scmp.eq.s32.totalorder %s24, 0
      %p348 = por %p346, %p347
      %p349 = scmp.ne.s32.totalorder %s338, %s341
      %p350 = scmp.eq.s32.totalorder %s29, 1
      %p351 = por %p349, %p350
      %p352 = scmp.ne.s32.totalorder %s341, %s342
      %p353 = scmp.eq.s32.totalorder %s29, 0
      %p354 = por %p352, %p353
      %p355 = scmp.ne.s32.totalorder %s341, %s342
      %p356 = scmp.eq.s32.totalorder %s30, 1
      %p357 = por %p355, %p356
      %p359 = scmp.ne.s32.totalorder %s342, %s358
      %p360 = scmp.eq.s32.totalorder %s30, 0
      %p361 = por %p359, %p360
      %s362 = ssub.s32 %s32, %s39
      %p363 = scmp.eq.s32.totalorder %s362, 0
      %s365 = sadd.s32 %s364, 1
      %s366 = scalar_select %p363, %s364, %s365
      %p369 = pneg %p363
      %p370 = scmp.eq.s32.totalorder %s24, 1
      %p371 = por %p369, %p370
      %p372 = scmp.ne.s32.totalorder %s364, %s367
      %p373 = scmp.eq.s32.totalorder %s24, 0
      %p374 = por %p372, %p373
      %p375 = scmp.ne.s32.totalorder %s364, %s367
      %p376 = scmp.eq.s32.totalorder %s29, 1
      %p377 = por %p375, %p376
      %p378 = scmp.ne.s32.totalorder %s367, %s368
      %p379 = scmp.eq.s32.totalorder %s29, 0
      %p380 = por %p378, %p379
      %p381 = scmp.ne.s32.totalorder %s367, %s368
      %p382 = scmp.eq.s32.totalorder %s30, 1
      %p383 = por %p381, %p382
      %p385 = scmp.ne.s32.totalorder %s368, %s384
      %p386 = scmp.eq.s32.totalorder %s30, 0
      %p387 = por %p385, %p386
      %s388 = ssub.s32 %s32, %s39
      %p389 = scmp.eq.s32.totalorder %s388, 0
      %s391 = sadd.s32 %s390, 1
      %s392 = scalar_select %p389, %s390, %s391
      %p395 = pneg %p389
      %p396 = scmp.eq.s32.totalorder %s24, 1
      %p397 = por %p395, %p396
      %p398 = scmp.ne.s32.totalorder %s390, %s393
      %p399 = scmp.eq.s32.totalorder %s24, 0
      %p400 = por %p398, %p399
      %p401 = scmp.ne.s32.totalorder %s390, %s393
      %p402 = scmp.eq.s32.totalorder %s29, 1
      %p403 = por %p401, %p402
      %p404 = scmp.ne.s32.totalorder %s393, %s394
      %p405 = scmp.eq.s32.totalorder %s29, 0
      %p406 = por %p404, %p405
      %p407 = scmp.ne.s32.totalorder %s393, %s394
      %p408 = scmp.eq.s32.totalorder %s30, 1
      %p409 = por %p407, %p408
      %p411 = scmp.ne.s32.totalorder %s394, %s410
      %p412 = scmp.eq.s32.totalorder %s30, 0
      %p413 = por %p411, %p412
      %s415 = sadd.s32 %s414, 1
      %p418 = scmp.eq.s32.totalorder %s24, 1
      %p419 = scmp.ne.s32.totalorder %s414, %s416
      %p420 = scmp.eq.s32.totalorder %s24, 0
      %p421 = por %p419, %p420
      %p422 = scmp.ne.s32.totalorder %s414, %s416
      %p423 = scmp.eq.s32.totalorder %s29, 1
      %p424 = por %p422, %p423
      %p425 = scmp.ne.s32.totalorder %s416, %s417
      %p426 = scmp.eq.s32.totalorder %s29, 0
      %p427 = por %p425, %p426
      %p428 = scmp.ne.s32.totalorder %s416, %s417
      %p429 = scmp.eq.s32.totalorder %s30, 1
      %p430 = por %p428, %p429
      %p432 = scmp.ne.s32.totalorder %s417, %s431
      %p433 = scmp.eq.s32.totalorder %s30, 0
      %p434 = por %p432, %p433
      %s436 = sadd.s32 %s435, 1
      %p439 = scmp.eq.s32.totalorder %s24, 1
      %p440 = scmp.ne.s32.totalorder %s435, %s437
      %p441 = scmp.eq.s32.totalorder %s24, 0
      %p442 = por %p440, %p441
      %p443 = scmp.ne.s32.totalorder %s435, %s437
      %p444 = scmp.eq.s32.totalorder %s29, 1
      %p445 = por %p443, %p444
      %p446 = scmp.ne.s32.totalorder %s437, %s438
      %p447 = scmp.eq.s32.totalorder %s29, 0
      %p448 = por %p446, %p447
      %p449 = scmp.ne.s32.totalorder %s437, %s438
      %p450 = scmp.eq.s32.totalorder %s30, 1
      %p451 = por %p449, %p450
      %p453 = scmp.ne.s32.totalorder %s438, %s452
      %p454 = scmp.eq.s32.totalorder %s30, 0
      %p455 = por %p453, %p454
      %s456 = ssub.s32 %s31, %s43
      %p457 = scmp.eq.s32.totalorder %s456, 0
      %s459 = sadd.s32 %s458, 1
      %s460 = scalar_select %p457, %s458, %s459
      %p463 = pneg %p457
      %p464 = scmp.eq.s32.totalorder %s24, 1
      %p465 = por %p463, %p464
      %p466 = scmp.ne.s32.totalorder %s458, %s461
      %p467 = scmp.eq.s32.totalorder %s24, 0
      %p468 = por %p466, %p467
      %p469 = scmp.ne.s32.totalorder %s458, %s461
      %p470 = scmp.eq.s32.totalorder %s29, 1
      %p471 = por %p469, %p470
      %p472 = scmp.ne.s32.totalorder %s461, %s462
      %p473 = scmp.eq.s32.totalorder %s29, 0
      %p474 = por %p472, %p473
      %p475 = scmp.ne.s32.totalorder %s461, %s462
      %p476 = scmp.eq.s32.totalorder %s30, 1
      %p477 = por %p475, %p476
      %p479 = scmp.ne.s32.totalorder %s462, %s478
      %p480 = scmp.eq.s32.totalorder %s30, 0
      %p481 = por %p479, %p480
      %p482 = scmp.le.s32.totalorder 1, %s24
      %p483 = scmp.lt.s32.totalorder %s24, 3
      %p484 = pnand %p482, %p483
      %p485 = pneg %p484
      // Predicated region
      $region9: #{pallas_vit_forward.1} parent=5 // pred_check
        _
      $region10: #{pallas_vit_forward.1} parent=5 // pred_check_branch
        %487 = sbr.rel (%p484) target = $region12
      $region11: #{pallas_vit_forward.1} parent=5 // pred_region
        %s488 = ssub.s32 %s24, 1
        // Predicated region
        $region13: #{pallas_vit_forward.1} parent=11 // pred_check
          %p489 = pneg %p62
        $region14: #{pallas_vit_forward.1} parent=11 // pred_check_branch
          %491 = sbr.rel (%p489) target = $region16
        $region15: #{pallas_vit_forward.1} parent=11 // pred_region
          %s492 = smul.u32 2, %s33
          %p493 = scmp.lt.s32.totalorder %s492, 1
          %s494 = scalar_select %p493, %s492, 1
          %s495 = smul.addr %s494, 2
          %s496 = smul.addr %s495, 2
          %s497 = scalar_lea.vmem %s0, %s496
          %s498 = smul.u32 2, %s33
        $region16: #{pallas_vit_forward.1} parent=11 // pred_fallthru
          _
        // Predicated region
        $region17: #{pallas_vit_forward.1} parent=11 // pred_check
          %p499 = pneg %p83
        $region18: #{pallas_vit_forward.1} parent=11 // pred_check_branch
          %501 = sbr.rel (%p499) target = $region20
        $region19: #{pallas_vit_forward.1} parent=11 // pred_region
          _
        $region20: #{pallas_vit_forward.1} parent=11 // pred_fallthru
          _
        // Predicated region
        $region21: #{pallas_vit_forward.1} parent=11 // pred_check
          %p502 = pneg %p104
        $region22: #{pallas_vit_forward.1} parent=11 // pred_check_branch
          %504 = sbr.rel (%p502) target = $region24
        $region23: #{pallas_vit_forward.1} parent=11 // pred_region
          _
        $region24: #{pallas_vit_forward.1} parent=11 // pred_fallthru
          _
        // Predicated region
        $region25: #{pallas_vit_forward.1} parent=11 // pred_check
          %p505 = pneg %p125
        $region26: #{pallas_vit_forward.1} parent=11 // pred_check_branch
          %507 = sbr.rel (%p505) target = $region28
        $region27: #{pallas_vit_forward.1} parent=11 // pred_region
          _
        $region28: #{pallas_vit_forward.1} parent=11 // pred_fallthru
          _
        // Predicated region
        $region29: #{pallas_vit_forward.1} parent=11 // pred_check
          %p508 = pneg %p146
        $region30: #{pallas_vit_forward.1} parent=11 // pred_check_branch
          %510 = sbr.rel (%p508) target = $region32
        $region31: #{pallas_vit_forward.1} parent=11 // pred_region
          _
        $region32: #{pallas_vit_forward.1} parent=11 // pred_fallthru
          _
        // Predicated region
        $region33: #{pallas_vit_forward.1} parent=11 // pred_check
          %p511 = pneg %p427
        $region34: #{pallas_vit_forward.1} parent=11 // pred_check_branch
          %513 = sbr.rel (%p511) target = $region36
        $region35: #{pallas_vit_forward.1} parent=11 // pred_region
          _
        $region36: #{pallas_vit_forward.1} parent=11 // pred_fallthru
          _
        // Predicated region
        $region37: #{pallas_vit_forward.1} parent=11 // pred_check
          %p514 = pneg %p448
        $region38: #{pallas_vit_forward.1} parent=11 // pred_check_branch
          %516 = sbr.rel (%p514) target = $region40
        $region39: #{pallas_vit_forward.1} parent=11 // pred_region
          _
        $region40: #{pallas_vit_forward.1} parent=11 // pred_fallthru
          _
      $region12: #{pallas_vit_forward.1} parent=5 // pred_fallthru
        _
      %p517 = scmp.lt.s32.totalorder %s24, 2
      // Predicated region
      $region41: #{pallas_vit_forward.1} parent=5 // pred_check
        %p518 = pneg %p517
      $region42: #{pallas_vit_forward.1} parent=5 // pred_check_branch
        %520 = sbr.rel (%p518) target = $region44
      $region43: #{pallas_vit_forward.1} parent=5 // pred_region
        // Predicated region
        $region45: #{pallas_vit_forward.1} parent=43 // pred_check
          %p521 = pneg %p166
        $region46: #{pallas_vit_forward.1} parent=43 // pred_check_branch
          %523 = sbr.rel (%p521) target = $region48
        $region47: #{pallas_vit_forward.1} parent=43 // pred_region
          %p524 = scmp.lt.s32.totalorder %s32, 1
          %s525 = scalar_select %p524, %s32, 1
          %s526 = smul.addr %s525, 4
          %s527 = smul.addr %s526, 4
          %s528 = scalar_lea.vmem %s5, %s527
        $region48: #{pallas_vit_forward.1} parent=43 // pred_fallthru
          _
        // Predicated region
        $region49: #{pallas_vit_forward.1} parent=43 // pred_check
          %p529 = pneg %p192
        $region50: #{pallas_vit_forward.1} parent=43 // pred_check_branch
          %531 = sbr.rel (%p529) target = $region52
        $region51: #{pallas_vit_forward.1} parent=43 // pred_region
          %p532 = scmp.lt.s32.totalorder %s32, 1
          %s533 = scalar_select %p532, %s32, 1
          %s534 = smul.addr %s533, 4
          %s535 = smul.addr %s534, 4
          %s536 = scalar_lea.vmem %s6, %s535
        $region52: #{pallas_vit_forward.1} parent=43 // pred_fallthru
          _
        // Predicated region
        $region53: #{pallas_vit_forward.1} parent=43 // pred_check
          %p537 = pneg %p218
        $region54: #{pallas_vit_forward.1} parent=43 // pred_check_branch
          %539 = sbr.rel (%p537) target = $region56
        $region55: #{pallas_vit_forward.1} parent=43 // pred_region
          %p540 = scmp.lt.s32.totalorder %s32, 1
          %s541 = scalar_select %p540, %s32, 1
          %s542 = scalar_lea.vmem %s7, %s541
        $region56: #{pallas_vit_forward.1} parent=43 // pred_fallthru
          _
        // Predicated region
        $region57: #{pallas_vit_forward.1} parent=43 // pred_check
          %p543 = pneg %p244
        $region58: #{pallas_vit_forward.1} parent=43 // pred_check_branch
          %545 = sbr.rel (%p543) target = $region60
        $region59: #{pallas_vit_forward.1} parent=43 // pred_region
          %p546 = scmp.lt.s32.totalorder %s32, 1
          %s547 = scalar_select %p546, %s32, 1
          %s548 = scalar_lea.vmem %s8, %s547
        $region60: #{pallas_vit_forward.1} parent=43 // pred_fallthru
          _
        // Predicated region
        $region61: #{pallas_vit_forward.1} parent=43 // pred_check
          %p549 = pneg %p270
        $region62: #{pallas_vit_forward.1} parent=43 // pred_check_branch
          %551 = sbr.rel (%p549) target = $region64
        $region63: #{pallas_vit_forward.1} parent=43 // pred_region
          %p552 = scmp.lt.s32.totalorder %s32, 1
          %s553 = scalar_select %p552, %s32, 1
          %s554 = smul.addr %s553, 4
          %s555 = smul.addr %s554, 4
          %s556 = scalar_lea.vmem %s9, %s555
        $region64: #{pallas_vit_forward.1} parent=43 // pred_fallthru
          _
        // Predicated region
        $region65: #{pallas_vit_forward.1} parent=43 // pred_check
          %p557 = pneg %p296
        $region66: #{pallas_vit_forward.1} parent=43 // pred_check_branch
          %559 = sbr.rel (%p557) target = $region68
        $region67: #{pallas_vit_forward.1} parent=43 // pred_region
          %p560 = scmp.lt.s32.totalorder %s32, 1
          %s561 = scalar_select %p560, %s32, 1
          %s562 = scalar_lea.vmem %s10, %s561
        $region68: #{pallas_vit_forward.1} parent=43 // pred_fallthru
          _
        // Predicated region
        $region69: #{pallas_vit_forward.1} parent=43 // pred_check
          %p563 = pneg %p322
        $region70: #{pallas_vit_forward.1} parent=43 // pred_check_branch
          %565 = sbr.rel (%p563) target = $region72
        $region71: #{pallas_vit_forward.1} parent=43 // pred_region
          %p566 = scmp.lt.s32.totalorder %s32, 1
          %s567 = scalar_select %p566, %s32, 1
          %s568 = smul.addr %s567, 8
          %s569 = smul.addr %s568, 4
          %s570 = scalar_lea.vmem %s11, %s569
        $region72: #{pallas_vit_forward.1} parent=43 // pred_fallthru
          _
        // Predicated region
        $region73: #{pallas_vit_forward.1} parent=43 // pred_check
          %p571 = pneg %p348
        $region74: #{pallas_vit_forward.1} parent=43 // pred_check_branch
          %573 = sbr.rel (%p571) target = $region76
        $region75: #{pallas_vit_forward.1} parent=43 // pred_region
          %p574 = scmp.lt.s32.totalorder %s32, 1
          %s575 = scalar_select %p574, %s32, 1
          %s576 = scalar_lea.vmem %s12, %s575
        $region76: #{pallas_vit_forward.1} parent=43 // pred_fallthru
          _
        // Predicated region
        $region77: #{pallas_vit_forward.1} parent=43 // pred_check
          %p577 = pneg %p374
        $region78: #{pallas_vit_forward.1} parent=43 // pred_check_branch
          %579 = sbr.rel (%p577) target = $region80
        $region79: #{pallas_vit_forward.1} parent=43 // pred_region
          %p580 = scmp.lt.s32.totalorder %s32, 1
          %s581 = scalar_select %p580, %s32, 1
          %s582 = scalar_lea.vmem %s13, %s581
        $region80: #{pallas_vit_forward.1} parent=43 // pred_fallthru
          _
        // Predicated region
        $region81: #{pallas_vit_forward.1} parent=43 // pred_check
          %p583 = pneg %p400
        $region82: #{pallas_vit_forward.1} parent=43 // pred_check_branch
          %585 = sbr.rel (%p583) target = $region84
        $region83: #{pallas_vit_forward.1} parent=43 // pred_region
          %p586 = scmp.lt.s32.totalorder %s32, 1
          %s587 = scalar_select %p586, %s32, 1
          %s588 = scalar_lea.vmem %s14, %s587
        $region84: #{pallas_vit_forward.1} parent=43 // pred_fallthru
          _
      $region44: #{pallas_vit_forward.1} parent=5 // pred_fallthru
        _
      %p589 = scmp.le.s32.totalorder 1, %s24
      %p590 = scmp.lt.s32.totalorder %s24, 3
      %p591 = pnand %p589, %p590
      %p592 = pneg %p591
      // Predicated region
      $region85: #{pallas_vit_forward.1} parent=5 // pred_check
        _
      $region86: #{pallas_vit_forward.1} parent=5 // pred_check_branch
        %594 = sbr.rel (%p591) target = $region88
      $region87: #{pallas_vit_forward.1} parent=5 // pred_region
        %s595 = ssub.s32 %s24, 1
        %s596 = smul.u32 2, %s33
        %p597 = scmp.lt.s32.totalorder %s596, 1
        %s598 = scalar_select %p597, %s596, 1
        %s599 = smul.addr %s598, 2
        %s600 = smul.addr %s599, 2
        %s601 = scalar_lea.vmem %s0, %s600
        %p602 = pneg %p62
        %p603 = pneg %p59
        %p604 = pneg %p83
        %p605 = pneg %p80
        %p606 = pneg %p104
        %p607 = pneg %p101
        %p608 = pneg %p125
        %p609 = pneg %p122
        %p610 = pneg %p146
        %p611 = pneg %p143
        %p612 = scmp.lt.s32.totalorder %s34, 1
        %s613 = scalar_select %p612, %s34, 1
        %s614 = smul.addr %s613, 4
        %s615 = smul.addr %s614, 4
        %s616 = scalar_lea.vmem %s5, %s615
        %p617 = pneg %p172
        %p618 = pneg %p169
        %p619 = scmp.lt.s32.totalorder %s34, 1
        %s620 = scalar_select %p619, %s34, 1
        %s621 = smul.addr %s620, 4
        %s622 = smul.addr %s621, 4
        %s623 = scalar_lea.vmem %s6, %s622
        %p624 = pneg %p198
        %p625 = pneg %p195
        %p626 = scmp.lt.s32.totalorder %s34, 1
        %s627 = scalar_select %p626, %s34, 1
        %s628 = scalar_lea.vmem %s7, %s627
        %p629 = pneg %p224
        %p630 = pneg %p221
        %p631 = scmp.lt.s32.totalorder %s34, 1
        %s632 = scalar_select %p631, %s34, 1
        %s633 = scalar_lea.vmem %s8, %s632
        %p634 = pneg %p250
        %p635 = pneg %p247
        %p636 = scmp.lt.s32.totalorder %s34, 1
        %s637 = scalar_select %p636, %s34, 1
        %s638 = smul.addr %s637, 4
        %s639 = smul.addr %s638, 4
        %s640 = scalar_lea.vmem %s9, %s639
        %p641 = pneg %p276
        %p642 = pneg %p273
        %p643 = scmp.lt.s32.totalorder %s34, 1
        %s644 = scalar_select %p643, %s34, 1
        %s645 = scalar_lea.vmem %s10, %s644
        %p646 = pneg %p302
        %p647 = pneg %p299
        %p648 = scmp.lt.s32.totalorder %s34, 1
        %s649 = scalar_select %p648, %s34, 1
        %s650 = smul.addr %s649, 8
        %s651 = smul.addr %s650, 4
        %s652 = scalar_lea.vmem %s11, %s651
        %p653 = pneg %p328
        %p654 = pneg %p325
        %p655 = scmp.lt.s32.totalorder %s34, 1
        %s656 = scalar_select %p655, %s34, 1
        %s657 = scalar_lea.vmem %s12, %s656
        %p658 = pneg %p354
        %p659 = pneg %p351
        %p660 = scmp.lt.s32.totalorder %s34, 1
        %s661 = scalar_select %p660, %s34, 1
        %s662 = scalar_lea.vmem %s13, %s661
        %p663 = pneg %p380
        %p664 = pneg %p377
        %p665 = scmp.lt.s32.totalorder %s34, 1
        %s666 = scalar_select %p665, %s34, 1
        %s667 = scalar_lea.vmem %s14, %s666
        %p668 = pneg %p406
        %p669 = pneg %p403
        %p670 = pneg %p427
        %p671 = pneg %p424
        %p672 = pneg %p448
        %p673 = pneg %p445
        %p674 = pneg %p474
        %p675 = pneg %p471
        %s676 = smul.u32 2, %s33
        %p677 = scmp.lt.s32.totalorder %s676, 1
        %s678 = scalar_select %p677, %s676, 1
        %s679 = smul.addr %s678, 2
        %s680 = smul.addr %s679, 2
        %s681 = scalar_lea.vmem %s0, %s680
        %s682 = smul.u32 2, %s33
        %p683 = scmp.lt.s32.totalorder %s34, 1
        %s684 = scalar_select %p683, %s34, 1
        %s685 = smul.addr %s684, 4
        %s686 = smul.addr %s685, 4
        %s687 = scalar_lea.vmem %s5, %s686
        %p688 = scmp.lt.s32.totalorder %s34, 1
        %s689 = scalar_select %p688, %s34, 1
        %s690 = smul.addr %s689, 4
        %s691 = smul.addr %s690, 4
        %s692 = scalar_lea.vmem %s6, %s691
        %p693 = scmp.lt.s32.totalorder %s34, 1
        %s694 = scalar_select %p693, %s34, 1
        %s695 = scalar_lea.vmem %s7, %s694
        %p696 = scmp.lt.s32.totalorder %s34, 1
        %s697 = scalar_select %p696, %s34, 1
        %s698 = scalar_lea.vmem %s8, %s697
        %p699 = scmp.lt.s32.totalorder %s34, 1
        %s700 = scalar_select %p699, %s34, 1
        %s701 = smul.addr %s700, 4
        %s702 = smul.addr %s701, 4
        %s703 = scalar_lea.vmem %s9, %s702
        %p704 = scmp.lt.s32.totalorder %s34, 1
        %s705 = scalar_select %p704, %s34, 1
        %s706 = scalar_lea.vmem %s10, %s705
        %p707 = scmp.lt.s32.totalorder %s34, 1
        %s708 = scalar_select %p707, %s34, 1
        %s709 = smul.addr %s708, 8
        %s710 = smul.addr %s709, 4
        %s711 = scalar_lea.vmem %s11, %s710
        %p712 = scmp.lt.s32.totalorder %s34, 1
        %s713 = scalar_select %p712, %s34, 1
        %s714 = scalar_lea.vmem %s12, %s713
        %p715 = scmp.lt.s32.totalorder %s34, 1
        %s716 = scalar_select %p715, %s34, 1
        %s717 = scalar_lea.vmem %s13, %s716
        %p718 = scmp.lt.s32.totalorder %s34, 1
        %s719 = scalar_select %p718, %s34, 1
        %s720 = scalar_lea.vmem %s14, %s719
        %s721 = smul.u32 2, %s33
        %p723 = scmp.eq.s32.totalorder %s34, 0
        // Predicated region
        $region89: #{pallas_vit_forward.1} parent=87 // pred_check
          %p724 = pneg %p723
        $region90: #{pallas_vit_forward.1} parent=87 // pred_check_branch
          %726 = sbr.rel (%p724) target = $region92
        $region91: #{pallas_vit_forward.1} parent=87 // pred_region
          %v727 = vld [vmem:[%s3] sm:$0x1]
          %v728 = vld [vmem:[%s4] sm:$0x1]
          %v729 = vadd.f32 %v727, %v728
          %v730 = vld [vmem:[%s4 + $0x1] sm:$0xf]
          %v731 = vld [vmem:[%s681] sm:$0xf]
          %v732 = vld [vmem:[%s1] sm:$0xf]
          %v733 = vld [vmem:[%s1 + $0x4] sm:$0xf]
          %v734 = vld [vmem:[%s1 + $0x8] sm:$0xf]
          %v735 = vld [vmem:[%s1 + $0xc] sm:$0xf]
          %v736 = vld [vmem:[%s1 + $0x10] sm:$0xf]
          %v737 = vld [vmem:[%s1 + $0x14] sm:$0xf]
          %v738 = vld [vmem:[%s1 + $0x18] sm:$0xf]
          %v739 = vld [vmem:[%s1 + $0x1c] sm:$0xf]
          %v740 = vld [vmem:[%s1 + $0x20] sm:$0xf]
          %v741 = vld [vmem:[%s1 + $0x24] sm:$0xf]
          %v742 = vld [vmem:[%s1 + $0x28] sm:$0xf]
          %v743 = vld [vmem:[%s1 + $0x2c] sm:$0xf]
          %v744 = vld [vmem:[%s1 + $0x30] sm:$0xf]
          %v745 = vld [vmem:[%s1 + $0x34] sm:$0xf]
          %v746 = vld [vmem:[%s1 + $0x38] sm:$0xf]
          %v747 = vld [vmem:[%s1 + $0x3c] sm:$0xf]
          %v748 = vld [vmem:[%s1 + $0x40] sm:$0xf]
          %v749 = vld [vmem:[%s1 + $0x44] sm:$0xf]
          %v750 = vld [vmem:[%s1 + $0x48] sm:$0xf]
          %v751 = vld [vmem:[%s1 + $0x4c] sm:$0xf]
          %v752 = vld [vmem:[%s1 + $0x50] sm:$0xf]
          %v753 = vld [vmem:[%s1 + $0x54] sm:$0xf]
          %v754 = vld [vmem:[%s1 + $0x58] sm:$0xf]
          %v755 = vld [vmem:[%s1 + $0x5c] sm:$0xf]
          %v756 = vld [vmem:[%s1 + $0x60] sm:$0xf]
          %v757 = vld [vmem:[%s1 + $0x64] sm:$0xf]
          %v758 = vld [vmem:[%s1 + $0x68] sm:$0xf]
          %v759 = vld [vmem:[%s1 + $0x6c] sm:$0xf]
          %v760 = vld [vmem:[%s1 + $0x70] sm:$0xf]
          %v761 = vld [vmem:[%s1 + $0x74] sm:$0xf]
          %v762 = vld [vmem:[%s1 + $0x78] sm:$0xf]
          %v763 = vld [vmem:[%s1 + $0x7c] sm:$0xf]
          %v764 = vld [vmem:[%s2] sm:$0x1]
          %v766 = vperm.slane %v764, 0
          %769 = vst [vmem:[#allocation1] ss:$4 sm:$0xff] %v731
          %v770 = vld.sshfl [vmem:[#allocation1] sm:$0xff pattern:$0x73625140]
          %v771 = vld.sshfl [vmem:[#allocation1 + $0x8] sm:$0xff pattern:$0x73625140]
          %v806 = vunpack.c.l.b16 %v732
          %v807 = vunpack.c.l.b16 %v733
          %v808 = vunpack.c.l.b16 %v734
          %v809 = vunpack.c.l.b16 %v735
          %v810 = vunpack.c.l.b16 %v736
          %v811 = vunpack.c.l.b16 %v737
          %v812 = vunpack.c.l.b16 %v738
          %v813 = vunpack.c.l.b16 %v739
          %v814 = vunpack.c.l.b16 %v740
          %v815 = vunpack.c.l.b16 %v741
          %v816 = vunpack.c.l.b16 %v742
          %v817 = vunpack.c.l.b16 %v743
          %v818 = vunpack.c.l.b16 %v744
          %v819 = vunpack.c.l.b16 %v745
          %v820 = vunpack.c.l.b16 %v746
          %v821 = vunpack.c.l.b16 %v747
          %v822 = vunpack.c.l.b16 %v748
          %v823 = vunpack.c.l.b16 %v749
          %v824 = vunpack.c.l.b16 %v750
          %v825 = vunpack.c.l.b16 %v751
          %v826 = vunpack.c.l.b16 %v752
          %v827 = vunpack.c.l.b16 %v753
          %v828 = vunpack.c.l.b16 %v754
          %v829 = vunpack.c.l.b16 %v755
          %v830 = vunpack.c.l.b16 %v756
          %v831 = vunpack.c.l.b16 %v757
          %v832 = vunpack.c.l.b16 %v758
          %v833 = vunpack.c.l.b16 %v759
          %v834 = vunpack.c.l.b16 %v760
          %v835 = vunpack.c.l.b16 %v761
          %v836 = vunpack.c.l.b16 %v762
          %v837 = vunpack.c.l.b16 %v763
          %v838 = vpack.c.b16 %v807, %v806
          %v839 = vpack.c.b16 %v809, %v808
          %v840 = vpack.c.b16 %v811, %v810
          %v841 = vpack.c.b16 %v813, %v812
          %v842 = vpack.c.b16 %v815, %v814
          %v843 = vpack.c.b16 %v817, %v816
          %v844 = vpack.c.b16 %v819, %v818
          %v845 = vpack.c.b16 %v821, %v820
          %v846 = vpack.c.b16 %v823, %v822
          %v847 = vpack.c.b16 %v825, %v824
          %v848 = vpack.c.b16 %v827, %v826
          %v849 = vpack.c.b16 %v829, %v828
          %v850 = vpack.c.b16 %v831, %v830
          %v851 = vpack.c.b16 %v833, %v832
          %v852 = vpack.c.b16 %v835, %v834
          %v853 = vpack.c.b16 %v837, %v836
          %870 = vmatpush.bf16.msra.mxu0 %v845
          %871 = vmatpush.bf16.msra.mxu0 %v844
          %872 = vmatpush.bf16.msra.mxu0 %v843
          %873 = vmatpush.bf16.msra.mxu0 %v842
          %874 = vmatpush.bf16.msra.mxu0 %v841
          %875 = vmatpush.bf16.msra.mxu0 %v840
          %876 = vmatpush.bf16.msra.mxu0 %v839
          %877 = vmatpush.bf16.msra.mxu0 %v838
          %878 = vmatmul.bf16.gmra.mxu0 %v770
          %v879 = vpop.f32.mrf.mxu0
          %v880 = vadd.f32 %v766, %v879
          %v881 = vpop.f32.mrf.mxu0
          %882 = vdwg.mxu0
          %883 = vmatpush.bf16.msra.mxu0 %v853
          %884 = vmatpush.bf16.msra.mxu0 %v852
          %885 = vmatpush.bf16.msra.mxu0 %v851
          %886 = vmatpush.bf16.msra.mxu0 %v850
          %887 = vmatpush.bf16.msra.mxu0 %v849
          %888 = vmatpush.bf16.msra.mxu0 %v848
          %889 = vmatpush.bf16.msra.mxu0 %v847
          %890 = vmatpush.bf16.msra.mxu0 %v846
          %891 = vmatmul.bf16.gmra.mxu0 %v771
          %v892 = vpop.f32.mrf.mxu0
          %v893 = vadd.f32 %v880, %v892
          %v894 = vpop.f32.mrf.mxu0
          %895 = vdwg.mxu0
          %vm896 = vcmask 253952
          %897 = vst.msk [vmem:[#allocation2] sm:$0x1] %vm896, %v729
          %v898 = vadd.f32 %v893, %v730
          %vm899 = vcmask 257024
          %900 = vst.msk [vmem:[#allocation2 + $0x1] sm:$0xf] %vm899, %v898
          %s901 = scalar_lea.vmem %s681, 4
          %v902 = vld [vmem:[%s901] sm:$0xf]
          %v903 = vld [vmem:[%s1] sm:$0xf]
          %v904 = vld [vmem:[%s1 + $0x4] sm:$0xf]
          %v905 = vld [vmem:[%s1 + $0x8] sm:$0xf]
          %v906 = vld [vmem:[%s1 + $0xc] sm:$0xf]
          %v907 = vld [vmem:[%s1 + $0x10] sm:$0xf]
          %v908 = vld [vmem:[%s1 + $0x14] sm:$0xf]
          %v909 = vld [vmem:[%s1 + $0x18] sm:$0xf]
          %v910 = vld [vmem:[%s1 + $0x1c] sm:$0xf]
          %v911 = vld [vmem:[%s1 + $0x20] sm:$0xf]
          %v912 = vld [vmem:[%s1 + $0x24] sm:$0xf]
          %v913 = vld [vmem:[%s1 + $0x28] sm:$0xf]
          %v914 = vld [vmem:[%s1 + $0x2c] sm:$0xf]
          %v915 = vld [vmem:[%s1 + $0x30] sm:$0xf]
          %v916 = vld [vmem:[%s1 + $0x34] sm:$0xf]
          %v917 = vld [vmem:[%s1 + $0x38] sm:$0xf]
          %v918 = vld [vmem:[%s1 + $0x3c] sm:$0xf]
          %v919 = vld [vmem:[%s1 + $0x40] sm:$0xf]
          %v920 = vld [vmem:[%s1 + $0x44] sm:$0xf]
          %v921 = vld [vmem:[%s1 + $0x48] sm:$0xf]
          %v922 = vld [vmem:[%s1 + $0x4c] sm:$0xf]
          %v923 = vld [vmem:[%s1 + $0x50] sm:$0xf]
          %v924 = vld [vmem:[%s1 + $0x54] sm:$0xf]
          %v925 = vld [vmem:[%s1 + $0x58] sm:$0xf]
          %v926 = vld [vmem:[%s1 + $0x5c] sm:$0xf]
          %v927 = vld [vmem:[%s1 + $0x60] sm:$0xf]
          %v928 = vld [vmem:[%s1 + $0x64] sm:$0xf]
          %v929 = vld [vmem:[%s1 + $0x68] sm:$0xf]
          %v930 = vld [vmem:[%s1 + $0x6c] sm:$0xf]
          %v931 = vld [vmem:[%s1 + $0x70] sm:$0xf]
          %v932 = vld [vmem:[%s1 + $0x74] sm:$0xf]
          %v933 = vld [vmem:[%s1 + $0x78] sm:$0xf]
          %v934 = vld [vmem:[%s1 + $0x7c] sm:$0xf]
          %v935 = vld [vmem:[%s2] sm:$0x1]
          %v937 = vperm.slane %v935, 0
          %940 = vst [vmem:[#allocation1] ss:$4 sm:$0xff] %v902
          %v941 = vld.sshfl [vmem:[#allocation1] sm:$0xff pattern:$0x73625140]
          %v942 = vld.sshfl [vmem:[#allocation1 + $0x8] sm:$0xff pattern:$0x73625140]
          %v977 = vunpack.c.l.b16 %v903
          %v978 = vunpack.c.l.b16 %v904
          %v979 = vunpack.c.l.b16 %v905
          %v980 = vunpack.c.l.b16 %v906
          %v981 = vunpack.c.l.b16 %v907
          %v982 = vunpack.c.l.b16 %v908
          %v983 = vunpack.c.l.b16 %v909
          %v984 = vunpack.c.l.b16 %v910
          %v985 = vunpack.c.l.b16 %v911
          %v986 = vunpack.c.l.b16 %v912
          %v987 = vunpack.c.l.b16 %v913
          %v988 = vunpack.c.l.b16 %v914
          %v989 = vunpack.c.l.b16 %v915
          %v990 = vunpack.c.l.b16 %v916
          %v991 = vunpack.c.l.b16 %v917
          %v992 = vunpack.c.l.b16 %v918
          %v993 = vunpack.c.l.b16 %v919
          %v994 = vunpack.c.l.b16 %v920
          %v995 = vunpack.c.l.b16 %v921
          %v996 = vunpack.c.l.b16 %v922
          %v997 = vunpack.c.l.b16 %v923
          %v998 = vunpack.c.l.b16 %v924
          %v999 = vunpack.c.l.b16 %v925
          %v1000 = vunpack.c.l.b16 %v926
          %v1001 = vunpack.c.l.b16 %v927
          %v1002 = vunpack.c.l.b16 %v928
          %v1003 = vunpack.c.l.b16 %v929
          %v1004 = vunpack.c.l.b16 %v930
          %v1005 = vunpack.c.l.b16 %v931
          %v1006 = vunpack.c.l.b16 %v932
          %v1007 = vunpack.c.l.b16 %v933
          %v1008 = vunpack.c.l.b16 %v934
          %v1009 = vpack.c.b16 %v978, %v977
          %v1010 = vpack.c.b16 %v980, %v979
          %v1011 = vpack.c.b16 %v982, %v981
          %v1012 = vpack.c.b16 %v984, %v983
          %v1013 = vpack.c.b16 %v986, %v985
          %v1014 = vpack.c.b16 %v988, %v987
          %v1015 = vpack.c.b16 %v990, %v989
          %v1016 = vpack.c.b16 %v992, %v991
          %v1017 = vpack.c.b16 %v994, %v993
          %v1018 = vpack.c.b16 %v996, %v995
          %v1019 = vpack.c.b16 %v998, %v997
          %v1020 = vpack.c.b16 %v1000, %v999
          %v1021 = vpack.c.b16 %v1002, %v1001
          %v1022 = vpack.c.b16 %v1004, %v1003
          %v1023 = vpack.c.b16 %v1006, %v1005
          %v1024 = vpack.c.b16 %v1008, %v1007
          %1041 = vmatpush.bf16.msra.mxu0 %v1016
          %1042 = vmatpush.bf16.msra.mxu0 %v1015
          %1043 = vmatpush.bf16.msra.mxu0 %v1014
          %1044 = vmatpush.bf16.msra.mxu0 %v1013
          %1045 = vmatpush.bf16.msra.mxu0 %v1012
          %1046 = vmatpush.bf16.msra.mxu0 %v1011
          %1047 = vmatpush.bf16.msra.mxu0 %v1010
          %1048 = vmatpush.bf16.msra.mxu0 %v1009
          %1049 = vmatmul.bf16.gmra.mxu0 %v941
          %v1050 = vpop.f32.mrf.mxu0
          %v1051 = vadd.f32 %v937, %v1050
          %v1052 = vpop.f32.mrf.mxu0
          %1053 = vdwg.mxu0
          %1054 = vmatpush.bf16.msra.mxu0 %v1024
          %1055 = vmatpush.bf16.msra.mxu0 %v1023
          %1056 = vmatpush.bf16.msra.mxu0 %v1022
          %1057 = vmatpush.bf16.msra.mxu0 %v1021
          %1058 = vmatpush.bf16.msra.mxu0 %v1020
          %1059 = vmatpush.bf16.msra.mxu0 %v1019
          %1060 = vmatpush.bf16.msra.mxu0 %v1018
          %1061 = vmatpush.bf16.msra.mxu0 %v1017
          %1062 = vmatmul.bf16.gmra.mxu0 %v942
          %v1063 = vpop.f32.mrf.mxu0
          %v1064 = vadd.f32 %v1051, %v1063
          %v1065 = vpop.f32.mrf.mxu0
          %1066 = vdwg.mxu0
          %1067 = vst.msk [vmem:[#allocation2 + $0x5] sm:$0x1] %vm896, %v729
          %v1068 = vadd.f32 %v1064, %v730
          %1069 = vst.msk [vmem:[#allocation2 + $0x6] sm:$0xf] %vm899, %v1068
        $region92: #{pallas_vit_forward.1} parent=87 // pred_fallthru
          _
        %v1070 = vld [vmem:[#allocation2] sm:$0xff]
        %v1071 = vld [vmem:[#allocation2 + $0x8] sm:$0x3]
        %v1072 = vpack.c.bf16 %v1071, %v1070
        %v1073 = vld [vmem:[%s687] sm:$0xf]
        %v1074 = vld [vmem:[%s687 + $0x4] sm:$0xf]
        %v1075 = vld [vmem:[%s687 + $0x8] sm:$0xf]
        %v1076 = vld [vmem:[%s687 + $0xc] sm:$0xf]
        %v1081 = vunpack.c.l.b16 %v1073
        %v1082 = vunpack.c.l.b16 %v1074
        %v1083 = vunpack.c.l.b16 %v1075
        %v1084 = vunpack.c.l.b16 %v1076
        %v1085 = vpack.c.b16 %v1082, %v1081
        %v1086 = vpack.c.b16 %v1084, %v1083
        %vm1089 = vcmask 261120
        %v1091 = vsel %vm1089, %v1072, 0
        %1093 = vmatpush.bf16.msra.mxu0 0
        %1094 = vmatpush.bf16.msra.mxu0 0
        %1095 = vmatpush.bf16.msra.mxu0 0
        %1096 = vmatpush.bf16.msra.mxu0 0
        %1097 = vmatpush.bf16.msra.mxu0 0
        %1098 = vmatpush.bf16.msra.mxu0 0
        %1099 = vmatpush.bf16.msra.mxu0 %v1086
        %1100 = vmatpush.bf16.msra.mxu0 %v1085
        %1101 = vmatmul.bf16.gmra.mxu0 %v1091
        %v1102 = vpop.f32.mrf.mxu0
        %v1103 = vadd.f32 0.0, %v1102
        %v1104 = vpop.f32.mrf.mxu0
        %v1105 = vadd.f32 0.0, %v1104
        %1106 = vdwg.mxu0
        %vm1107 = vcmask 785408
        %1108 = vst.msk [vmem:[#allocation3] sm:$0xff] %vm1107, %v1103
        %vm1109 = vcmask 779264
        %1110 = vst.msk [vmem:[#allocation3 + $0x8] sm:$0x3] %vm1109, %v1105
        %v1111 = vld [vmem:[#allocation3] sm:$0x1f]
        %v1112 = vmul.f32 %v1111, 0.35355338
        %v1113 = vpack.c.bf16 %v1112, %v1112
        %v1114 = vpack.c.bf16 %v1111, %v1111
        %1116 = vrot.lane.b32.xlu0 %v1114, 96
        %v1117 = vpop.permute.xlu0 %1116
        %vm1118 = vcmask 64512
        %v1120 = vsel %vm1118, %v1113, 0
        %v1123 = vsel %vm1118, %v1117, 0
        %1125 = vmatpush.bf16.xpose.msra.mxu0 0
        %1126 = vmatpush.bf16.xpose.msra.mxu0 0
        %1127 = vmatpush.bf16.xpose.msra.mxu0 0
        %1128 = vmatpush.bf16.xpose.msra.mxu0 0
        %1129 = vmatpush.bf16.xpose.msra.mxu0 0
        %1130 = vmatpush.bf16.xpose.msra.mxu0 0
        %1131 = vmatpush.bf16.xpose.msra.mxu0 0
        %1132 = vmatpush.bf16.xpose.msra.mxu0 %v1123
        %1133 = vmatmul.bf16.gmra.mxu0 %v1120
        %v1134 = vpop.f32.mrf.mxu0
        %v1135 = vadd.f32 0.0, %v1134
        %v1136 = vpop.f32.mrf.mxu0
        %1137 = vdwg.mxu0
        %vm1138 = vcmask 36864
        %v1139 = vsel %vm1138, %v1135, -inf
        %1140 = vmax.xlane.f32.xlu0 %v1139
        %v1141 = vpop.xlane.xlu0 %1140
        %v1142 = vsub.f32 %v1135, %v1141
        %v1143 = vmul.f32 %v1142, 1.442695
        %v1144 = vpow.pop %v1143
        %v1145 = vsel %vm1138, %v1144, 0.0
        %1146 = vadd.xlane.f32.xlu0 %v1145
        %v1147 = vpop.xlane.xlu0 %1146
        %v1148 = vrcp.pop %v1147
        %v1149 = vpack.c.bf16 %v1144, %v1144
        %1150 = vrot.lane.b32.xlu0 %v1114, 64
        %v1151 = vpop.permute.xlu0 %1150
        %vm1152 = vcmask 39936
        %v1154 = vsel %vm1152, %v1149, 0
        %vm1156 = vcmask 1041408
        %vm1157 = vcmask 1042432
        %v1158 = vsel %vm1156, 4294967295, 65535
        %v1159 = vsel %vm1157, %v1158, 0
        %v1161 = vand.u32 %v1151, %v1159
        %1163 = vmatpush.bf16.msra.mxu0 0
        %1164 = vmatpush.bf16.msra.mxu0 0
        %1165 = vmatpush.bf16.msra.mxu0 0
        %1166 = vmatpush.bf16.msra.mxu0 0
        %1167 = vmatpush.bf16.msra.mxu0 0
        %1168 = vmatpush.bf16.msra.mxu0 0
        %1169 = vmatpush.bf16.msra.mxu0 0
        %1170 = vmatpush.bf16.msra.mxu0 %v1161
        %1171 = vmatmul.bf16.gmra.mxu0 %v1154
        %v1172 = vpop.f32.mrf.mxu0
        %v1173 = vadd.f32 0.0, %v1172
        %v1174 = vpop.f32.mrf.mxu0
        %1175 = vdwg.mxu0
        %v1176 = vmul.f32 %v1173, %v1148
        %vm1177 = vcmask 61440
        %1178 = vst.msk [vmem:[#allocation4] sm:$0x1f] %vm1177, %v1176
        %v1179 = vld [vmem:[#allocation3] sm:$0x1f]
        %v1180 = vmul.f32 %v1179, 0.35355338
        %v1181 = vpack.c.bf16 %v1180, %v1180
        %v1182 = vpack.c.bf16 %v1179, %v1179
        %1184 = vrot.lane.b32.xlu0 %v1181, 120
        %v1185 = vpop.permute.xlu0 %1184
        %1187 = vrot.lane.b32.xlu0 %v1182, 88
        %v1188 = vpop.permute.xlu0 %1187
        %v1190 = vsel %vm1118, %v1185, 0
        %v1193 = vsel %vm1118, %v1188, 0
        %1195 = vmatpush.bf16.xpose.msra.mxu0 0
        %1196 = vmatpush.bf16.xpose.msra.mxu0 0
        %1197 = vmatpush.bf16.xpose.msra.mxu0 0
        %1198 = vmatpush.bf16.xpose.msra.mxu0 0
        %1199 = vmatpush.bf16.xpose.msra.mxu0 0
        %1200 = vmatpush.bf16.xpose.msra.mxu0 0
        %1201 = vmatpush.bf16.xpose.msra.mxu0 0
        %1202 = vmatpush.bf16.xpose.msra.mxu0 %v1193
        %1203 = vmatmul.bf16.gmra.mxu0 %v1190
        %v1204 = vpop.f32.mrf.mxu0
        %v1205 = vadd.f32 0.0, %v1204
        %v1206 = vpop.f32.mrf.mxu0
        %1207 = vdwg.mxu0
        %v1208 = vsel %vm1138, %v1205, -inf
        %1209 = vmax.xlane.f32.xlu0 %v1208
        %v1210 = vpop.xlane.xlu0 %1209
        %v1211 = vsub.f32 %v1205, %v1210
        %v1212 = vmul.f32 %v1211, 1.442695
        %v1213 = vpow.pop %v1212
        %v1214 = vsel %vm1138, %v1213, 0.0
        %1215 = vadd.xlane.f32.xlu0 %v1214
        %v1216 = vpop.xlane.xlu0 %1215
        %v1217 = vrcp.pop %v1216
        %v1218 = vpack.c.bf16 %v1213, %v1213
        %1219 = vrot.lane.b32.xlu0 %v1182, 56
        %v1220 = vpop.permute.xlu0 %1219
        %v1222 = vsel %vm1152, %v1218, 0
        %v1225 = vand.u32 %v1220, %v1159
        %1227 = vmatpush.bf16.msra.mxu0 0
        %1228 = vmatpush.bf16.msra.mxu0 0
        %1229 = vmatpush.bf16.msra.mxu0 0
        %1230 = vmatpush.bf16.msra.mxu0 0
        %1231 = vmatpush.bf16.msra.mxu0 0
        %1232 = vmatpush.bf16.msra.mxu0 0
        %1233 = vmatpush.bf16.msra.mxu0 0
        %1234 = vmatpush.bf16.msra.mxu0 %v1225
        %1235 = vmatmul.bf16.gmra.mxu0 %v1222
        %v1236 = vpop.f32.mrf.mxu0
        %v1237 = vadd.f32 0.0, %v1236
        %v1238 = vpop.f32.mrf.mxu0
        %1239 = vdwg.mxu0
        %v1240 = vmul.f32 %v1237, %v1217
        %1242 = vrot.lane.b32.xlu0 %v1240, 8
        %v1243 = vpop.permute.xlu0 %1242
        %vm1245 = vcmask 127040
        %1246 = vst.msk [vmem:[#allocation4] sm:$0x1f] %vm1245, %v1243
        %v1247 = vld [vmem:[#allocation3] sm:$0x1f]
        %v1248 = vmul.f32 %v1247, 0.35355338
        %v1249 = vpack.c.bf16 %v1248, %v1248
        %v1250 = vpack.c.bf16 %v1247, %v1247
        %1252 = vrot.lane.b32.xlu0 %v1249, 112
        %v1253 = vpop.permute.xlu0 %1252
        %1255 = vrot.lane.b32.xlu0 %v1250, 80
        %v1256 = vpop.permute.xlu0 %1255
        %v1258 = vsel %vm1118, %v1253, 0
        %v1261 = vsel %vm1118, %v1256, 0
        %1263 = vmatpush.bf16.xpose.msra.mxu0 0
        %1264 = vmatpush.bf16.xpose.msra.mxu0 0
        %1265 = vmatpush.bf16.xpose.msra.mxu0 0
        %1266 = vmatpush.bf16.xpose.msra.mxu0 0
        %1267 = vmatpush.bf16.xpose.msra.mxu0 0
        %1268 = vmatpush.bf16.xpose.msra.mxu0 0
        %1269 = vmatpush.bf16.xpose.msra.mxu0 0
        %1270 = vmatpush.bf16.xpose.msra.mxu0 %v1261
        %1271 = vmatmul.bf16.gmra.mxu0 %v1258
        %v1272 = vpop.f32.mrf.mxu0
        %v1273 = vadd.f32 0.0, %v1272
        %v1274 = vpop.f32.mrf.mxu0
        %1275 = vdwg.mxu0
        %v1276 = vsel %vm1138, %v1273, -inf
        %1277 = vmax.xlane.f32.xlu0 %v1276
        %v1278 = vpop.xlane.xlu0 %1277
        %v1279 = vsub.f32 %v1273, %v1278
        %v1280 = vmul.f32 %v1279, 1.442695
        %v1281 = vpow.pop %v1280
        %v1282 = vsel %vm1138, %v1281, 0.0
        %1283 = vadd.xlane.f32.xlu0 %v1282
        %v1284 = vpop.xlane.xlu0 %1283
        %v1285 = vrcp.pop %v1284
        %v1286 = vpack.c.bf16 %v1281, %v1281
        %1287 = vrot.lane.b32.xlu0 %v1250, 48
        %v1288 = vpop.permute.xlu0 %1287
        %v1290 = vsel %vm1152, %v1286, 0
        %v1293 = vand.u32 %v1288, %v1159
        %1295 = vmatpush.bf16.msra.mxu0 0
        %1296 = vmatpush.bf16.msra.mxu0 0
        %1297 = vmatpush.bf16.msra.mxu0 0
        %1298 = vmatpush.bf16.msra.mxu0 0
        %1299 = vmatpush.bf16.msra.mxu0 0
        %1300 = vmatpush.bf16.msra.mxu0 0
        %1301 = vmatpush.bf16.msra.mxu0 0
        %1302 = vmatpush.bf16.msra.mxu0 %v1293
        %1303 = vmatmul.bf16.gmra.mxu0 %v1290
        %v1304 = vpop.f32.mrf.mxu0
        %v1305 = vadd.f32 0.0, %v1304
        %v1306 = vpop.f32.mrf.mxu0
        %1307 = vdwg.mxu0
        %v1308 = vmul.f32 %v1305, %v1285
        %1310 = vrot.lane.b32.xlu0 %v1308, 16
        %v1311 = vpop.permute.xlu0 %1310
        %vm1313 = vcmask 192640
        %1314 = vst.msk [vmem:[#allocation4] sm:$0x1f] %vm1313, %v1311
        %v1315 = vld [vmem:[#allocation3] sm:$0x1f]
        %v1316 = vmul.f32 %v1315, 0.35355338
        %v1317 = vpack.c.bf16 %v1316, %v1316
        %v1318 = vpack.c.bf16 %v1315, %v1315
        %1320 = vrot.lane.b32.xlu0 %v1317, 104
        %v1321 = vpop.permute.xlu0 %1320
        %1323 = vrot.lane.b32.xlu0 %v1318, 72
        %v1324 = vpop.permute.xlu0 %1323
        %v1326 = vsel %vm1118, %v1321, 0
        %v1329 = vsel %vm1118, %v1324, 0
        %1331 = vmatpush.bf16.xpose.msra.mxu0 0
        %1332 = vmatpush.bf16.xpose.msra.mxu0 0
        %1333 = vmatpush.bf16.xpose.msra.mxu0 0
        %1334 = vmatpush.bf16.xpose.msra.mxu0 0
        %1335 = vmatpush.bf16.xpose.msra.mxu0 0
        %1336 = vmatpush.bf16.xpose.msra.mxu0 0
        %1337 = vmatpush.bf16.xpose.msra.mxu0 0
        %1338 = vmatpush.bf16.xpose.msra.mxu0 %v1329
        %1339 = vmatmul.bf16.gmra.mxu0 %v1326
        %v1340 = vpop.f32.mrf.mxu0
        %v1341 = vadd.f32 0.0, %v1340
        %v1342 = vpop.f32.mrf.mxu0
        %1343 = vdwg.mxu0
        %v1344 = vsel %vm1138, %v1341, -inf
        %1345 = vmax.xlane.f32.xlu0 %v1344
        %v1346 = vpop.xlane.xlu0 %1345
        %v1347 = vsub.f32 %v1341, %v1346
        %v1348 = vmul.f32 %v1347, 1.442695
        %v1349 = vpow.pop %v1348
        %v1350 = vsel %vm1138, %v1349, 0.0
        %1351 = vadd.xlane.f32.xlu0 %v1350
        %v1352 = vpop.xlane.xlu0 %1351
        %v1353 = vrcp.pop %v1352
        %v1354 = vpack.c.bf16 %v1349, %v1349
        %1355 = vrot.lane.b32.xlu0 %v1318, 40
        %v1356 = vpop.permute.xlu0 %1355
        %v1358 = vsel %vm1152, %v1354, 0
        %v1361 = vand.u32 %v1356, %v1159
        %1363 = vmatpush.bf16.msra.mxu0 0
        %1364 = vmatpush.bf16.msra.mxu0 0
        %1365 = vmatpush.bf16.msra.mxu0 0
        %1366 = vmatpush.bf16.msra.mxu0 0
        %1367 = vmatpush.bf16.msra.mxu0 0
        %1368 = vmatpush.bf16.msra.mxu0 0
        %1369 = vmatpush.bf16.msra.mxu0 0
        %1370 = vmatpush.bf16.msra.mxu0 %v1361
        %1371 = vmatmul.bf16.gmra.mxu0 %v1358
        %v1372 = vpop.f32.mrf.mxu0
        %v1373 = vadd.f32 0.0, %v1372
        %v1374 = vpop.f32.mrf.mxu0
        %1375 = vdwg.mxu0
        %v1376 = vmul.f32 %v1373, %v1353
        %1378 = vrot.lane.b32.xlu0 %v1376, 24
        %v1379 = vpop.permute.xlu0 %1378
        %vm1381 = vcmask 258240
        %1382 = vst.msk [vmem:[#allocation4] sm:$0x1f] %vm1381, %v1379
        %v1383 = vld [vmem:[#allocation3 + $0x5] sm:$0x1f]
        %v1384 = vmul.f32 %v1383, 0.35355338
        %v1385 = vpack.c.bf16 %v1384, %v1384
        %v1386 = vpack.c.bf16 %v1383, %v1383
        %1388 = vrot.lane.b32.xlu0 %v1386, 96
        %v1389 = vpop.permute.xlu0 %1388
        %v1391 = vsel %vm1118, %v1385, 0
        %v1394 = vsel %vm1118, %v1389, 0
        %1396 = vmatpush.bf16.xpose.msra.mxu0 0
        %1397 = vmatpush.bf16.xpose.msra.mxu0 0
        %1398 = vmatpush.bf16.xpose.msra.mxu0 0
        %1399 = vmatpush.bf16.xpose.msra.mxu0 0
        %1400 = vmatpush.bf16.xpose.msra.mxu0 0
        %1401 = vmatpush.bf16.xpose.msra.mxu0 0
        %1402 = vmatpush.bf16.xpose.msra.mxu0 0
        %1403 = vmatpush.bf16.xpose.msra.mxu0 %v1394
        %1404 = vmatmul.bf16.gmra.mxu0 %v1391
        %v1405 = vpop.f32.mrf.mxu0
        %v1406 = vadd.f32 0.0, %v1405
        %v1407 = vpop.f32.mrf.mxu0
        %1408 = vdwg.mxu0
        %v1409 = vsel %vm1138, %v1406, -inf
        %1410 = vmax.xlane.f32.xlu0 %v1409
        %v1411 = vpop.xlane.xlu0 %1410
        %v1412 = vsub.f32 %v1406, %v1411
        %v1413 = vmul.f32 %v1412, 1.442695
        %v1414 = vpow.pop %v1413
        %v1415 = vsel %vm1138, %v1414, 0.0
        %1416 = vadd.xlane.f32.xlu0 %v1415
        %v1417 = vpop.xlane.xlu0 %1416
        %v1418 = vrcp.pop %v1417
        %v1419 = vpack.c.bf16 %v1414, %v1414
        %1420 = vrot.lane.b32.xlu0 %v1386, 64
        %v1421 = vpop.permute.xlu0 %1420
        %v1423 = vsel %vm1152, %v1419, 0
        %v1426 = vand.u32 %v1421, %v1159
        %1428 = vmatpush.bf16.msra.mxu0 0
        %1429 = vmatpush.bf16.msra.mxu0 0
        %1430 = vmatpush.bf16.msra.mxu0 0
        %1431 = vmatpush.bf16.msra.mxu0 0
        %1432 = vmatpush.bf16.msra.mxu0 0
        %1433 = vmatpush.bf16.msra.mxu0 0
        %1434 = vmatpush.bf16.msra.mxu0 0
        %1435 = vmatpush.bf16.msra.mxu0 %v1426
        %1436 = vmatmul.bf16.gmra.mxu0 %v1423
        %v1437 = vpop.f32.mrf.mxu0
        %v1438 = vadd.f32 0.0, %v1437
        %v1439 = vpop.f32.mrf.mxu0
        %1440 = vdwg.mxu0
        %v1441 = vmul.f32 %v1438, %v1418
        %1442 = vst.msk [vmem:[#allocation4 + $0x5] sm:$0x1f] %vm1177, %v1441
        %v1443 = vld [vmem:[#allocation3 + $0x5] sm:$0x1f]
        %v1444 = vmul.f32 %v1443, 0.35355338
        %v1445 = vpack.c.bf16 %v1444, %v1444
        %v1446 = vpack.c.bf16 %v1443, %v1443
        %1448 = vrot.lane.b32.xlu0 %v1445, 120
        %v1449 = vpop.permute.xlu0 %1448
        %1451 = vrot.lane.b32.xlu0 %v1446, 88
        %v1452 = vpop.permute.xlu0 %1451
        %v1454 = vsel %vm1118, %v1449, 0
        %v1457 = vsel %vm1118, %v1452, 0
        %1459 = vmatpush.bf16.xpose.msra.mxu0 0
        %1460 = vmatpush.bf16.xpose.msra.mxu0 0
        %1461 = vmatpush.bf16.xpose.msra.mxu0 0
        %1462 = vmatpush.bf16.xpose.msra.mxu0 0
        %1463 = vmatpush.bf16.xpose.msra.mxu0 0
        %1464 = vmatpush.bf16.xpose.msra.mxu0 0
        %1465 = vmatpush.bf16.xpose.msra.mxu0 0
        %1466 = vmatpush.bf16.xpose.msra.mxu0 %v1457
        %1467 = vmatmul.bf16.gmra.mxu0 %v1454
        %v1468 = vpop.f32.mrf.mxu0
        %v1469 = vadd.f32 0.0, %v1468
        %v1470 = vpop.f32.mrf.mxu0
        %1471 = vdwg.mxu0
        %v1472 = vsel %vm1138, %v1469, -inf
        %1473 = vmax.xlane.f32.xlu0 %v1472
        %v1474 = vpop.xlane.xlu0 %1473
        %v1475 = vsub.f32 %v1469, %v1474
        %v1476 = vmul.f32 %v1475, 1.442695
        %v1477 = vpow.pop %v1476
        %v1478 = vsel %vm1138, %v1477, 0.0
        %1479 = vadd.xlane.f32.xlu0 %v1478
        %v1480 = vpop.xlane.xlu0 %1479
        %v1481 = vrcp.pop %v1480
        %v1482 = vpack.c.bf16 %v1477, %v1477
        %1483 = vrot.lane.b32.xlu0 %v1446, 56
        %v1484 = vpop.permute.xlu0 %1483
        %v1486 = vsel %vm1152, %v1482, 0
        %v1489 = vand.u32 %v1484, %v1159
        %1491 = vmatpush.bf16.msra.mxu0 0
        %1492 = vmatpush.bf16.msra.mxu0 0
        %1493 = vmatpush.bf16.msra.mxu0 0
        %1494 = vmatpush.bf16.msra.mxu0 0
        %1495 = vmatpush.bf16.msra.mxu0 0
        %1496 = vmatpush.bf16.msra.mxu0 0
        %1497 = vmatpush.bf16.msra.mxu0 0
        %1498 = vmatpush.bf16.msra.mxu0 %v1489
        %1499 = vmatmul.bf16.gmra.mxu0 %v1486
        %v1500 = vpop.f32.mrf.mxu0
        %v1501 = vadd.f32 0.0, %v1500
        %v1502 = vpop.f32.mrf.mxu0
        %1503 = vdwg.mxu0
        %v1504 = vmul.f32 %v1501, %v1481
        %1506 = vrot.lane.b32.xlu0 %v1504, 8
        %v1507 = vpop.permute.xlu0 %1506
        %1509 = vst.msk [vmem:[#allocation4 + $0x5] sm:$0x1f] %vm1245, %v1507
        %v1510 = vld [vmem:[#allocation3 + $0x5] sm:$0x1f]
        %v1511 = vmul.f32 %v1510, 0.35355338
        %v1512 = vpack.c.bf16 %v1511, %v1511
        %v1513 = vpack.c.bf16 %v1510, %v1510
        %1515 = vrot.lane.b32.xlu0 %v1512, 112
        %v1516 = vpop.permute.xlu0 %1515
        %1518 = vrot.lane.b32.xlu0 %v1513, 80
        %v1519 = vpop.permute.xlu0 %1518
        %v1521 = vsel %vm1118, %v1516, 0
        %v1524 = vsel %vm1118, %v1519, 0
        %1526 = vmatpush.bf16.xpose.msra.mxu0 0
        %1527 = vmatpush.bf16.xpose.msra.mxu0 0
        %1528 = vmatpush.bf16.xpose.msra.mxu0 0
        %1529 = vmatpush.bf16.xpose.msra.mxu0 0
        %1530 = vmatpush.bf16.xpose.msra.mxu0 0
        %1531 = vmatpush.bf16.xpose.msra.mxu0 0
        %1532 = vmatpush.bf16.xpose.msra.mxu0 0
        %1533 = vmatpush.bf16.xpose.msra.mxu0 %v1524
        %1534 = vmatmul.bf16.gmra.mxu0 %v1521
        %v1535 = vpop.f32.mrf.mxu0
        %v1536 = vadd.f32 0.0, %v1535
        %v1537 = vpop.f32.mrf.mxu0
        %1538 = vdwg.mxu0
        %v1539 = vsel %vm1138, %v1536, -inf
        %1540 = vmax.xlane.f32.xlu0 %v1539
        %v1541 = vpop.xlane.xlu0 %1540
        %v1542 = vsub.f32 %v1536, %v1541
        %v1543 = vmul.f32 %v1542, 1.442695
        %v1544 = vpow.pop %v1543
        %v1545 = vsel %vm1138, %v1544, 0.0
        %1546 = vadd.xlane.f32.xlu0 %v1545
        %v1547 = vpop.xlane.xlu0 %1546
        %v1548 = vrcp.pop %v1547
        %v1549 = vpack.c.bf16 %v1544, %v1544
        %1550 = vrot.lane.b32.xlu0 %v1513, 48
        %v1551 = vpop.permute.xlu0 %1550
        %v1553 = vsel %vm1152, %v1549, 0
        %v1556 = vand.u32 %v1551, %v1159
        %1558 = vmatpush.bf16.msra.mxu0 0
        %1559 = vmatpush.bf16.msra.mxu0 0
        %1560 = vmatpush.bf16.msra.mxu0 0
        %1561 = vmatpush.bf16.msra.mxu0 0
        %1562 = vmatpush.bf16.msra.mxu0 0
        %1563 = vmatpush.bf16.msra.mxu0 0
        %1564 = vmatpush.bf16.msra.mxu0 0
        %1565 = vmatpush.bf16.msra.mxu0 %v1556
        %1566 = vmatmul.bf16.gmra.mxu0 %v1553
        %v1567 = vpop.f32.mrf.mxu0
        %v1568 = vadd.f32 0.0, %v1567
        %v1569 = vpop.f32.mrf.mxu0
        %1570 = vdwg.mxu0
        %v1571 = vmul.f32 %v1568, %v1548
        %1573 = vrot.lane.b32.xlu0 %v1571, 16
        %v1574 = vpop.permute.xlu0 %1573
        %1576 = vst.msk [vmem:[#allocation4 + $0x5] sm:$0x1f] %vm1313, %v1574
        %v1577 = vld [vmem:[#allocation3 + $0x5] sm:$0x1f]
        %v1578 = vmul.f32 %v1577, 0.35355338
        %v1579 = vpack.c.bf16 %v1578, %v1578
        %v1580 = vpack.c.bf16 %v1577, %v1577
        %1582 = vrot.lane.b32.xlu0 %v1579, 104
        %v1583 = vpop.permute.xlu0 %1582
        %1585 = vrot.lane.b32.xlu0 %v1580, 72
        %v1586 = vpop.permute.xlu0 %1585
        %v1588 = vsel %vm1118, %v1583, 0
        %v1591 = vsel %vm1118, %v1586, 0
        %1593 = vmatpush.bf16.xpose.msra.mxu0 0
        %1594 = vmatpush.bf16.xpose.msra.mxu0 0
        %1595 = vmatpush.bf16.xpose.msra.mxu0 0
        %1596 = vmatpush.bf16.xpose.msra.mxu0 0
        %1597 = vmatpush.bf16.xpose.msra.mxu0 0
        %1598 = vmatpush.bf16.xpose.msra.mxu0 0
        %1599 = vmatpush.bf16.xpose.msra.mxu0 0
        %1600 = vmatpush.bf16.xpose.msra.mxu0 %v1591
        %1601 = vmatmul.bf16.gmra.mxu0 %v1588
        %v1602 = vpop.f32.mrf.mxu0
        %v1603 = vadd.f32 0.0, %v1602
        %v1604 = vpop.f32.mrf.mxu0
        %1605 = vdwg.mxu0
        %v1606 = vsel %vm1138, %v1603, -inf
        %1607 = vmax.xlane.f32.xlu0 %v1606
        %v1608 = vpop.xlane.xlu0 %1607
        %v1609 = vsub.f32 %v1603, %v1608
        %v1610 = vmul.f32 %v1609, 1.442695
        %v1611 = vpow.pop %v1610
        %v1612 = vsel %vm1138, %v1611, 0.0
        %1613 = vadd.xlane.f32.xlu0 %v1612
        %v1614 = vpop.xlane.xlu0 %1613
        %v1615 = vrcp.pop %v1614
        %v1616 = vpack.c.bf16 %v1611, %v1611
        %1617 = vrot.lane.b32.xlu0 %v1580, 40
        %v1618 = vpop.permute.xlu0 %1617
        %v1620 = vsel %vm1152, %v1616, 0
        %v1623 = vand.u32 %v1618, %v1159
        %1625 = vmatpush.bf16.msra.mxu0 0
        %1626 = vmatpush.bf16.msra.mxu0 0
        %1627 = vmatpush.bf16.msra.mxu0 0
        %1628 = vmatpush.bf16.msra.mxu0 0
        %1629 = vmatpush.bf16.msra.mxu0 0
        %1630 = vmatpush.bf16.msra.mxu0 0
        %1631 = vmatpush.bf16.msra.mxu0 0
        %1632 = vmatpush.bf16.msra.mxu0 %v1623
        %1633 = vmatmul.bf16.gmra.mxu0 %v1620
        %v1634 = vpop.f32.mrf.mxu0
        %v1635 = vadd.f32 0.0, %v1634
        %v1636 = vpop.f32.mrf.mxu0
        %1637 = vdwg.mxu0
        %v1638 = vmul.f32 %v1635, %v1615
        %1640 = vrot.lane.b32.xlu0 %v1638, 24
        %v1641 = vpop.permute.xlu0 %1640
        %1643 = vst.msk [vmem:[#allocation4 + $0x5] sm:$0x1f] %vm1381, %v1641
        %v1644 = vld [vmem:[#allocation4] sm:$0xff]
        %v1645 = vld [vmem:[#allocation4 + $0x8] sm:$0x3]
        %v1646 = vpack.c.bf16 %v1645, %v1644
        %v1647 = vld [vmem:[%s692] sm:$0xf]
        %v1648 = vld [vmem:[%s692 + $0x4] sm:$0xf]
        %v1649 = vld [vmem:[%s692 + $0x8] sm:$0xf]
        %v1650 = vld [vmem:[%s692 + $0xc] sm:$0xf]
        %v1655 = vunpack.c.l.b16 %v1647
        %v1656 = vunpack.c.l.b16 %v1648
        %v1657 = vunpack.c.l.b16 %v1649
        %v1658 = vunpack.c.l.b16 %v1650
        %v1659 = vpack.c.b16 %v1656, %v1655
        %v1660 = vpack.c.b16 %v1658, %v1657
        %v1664 = vsel %vm1089, %v1646, 0
        %1666 = vmatpush.bf16.msra.mxu0 0
        %1667 = vmatpush.bf16.msra.mxu0 0
        %1668 = vmatpush.bf16.msra.mxu0 0
        %1669 = vmatpush.bf16.msra.mxu0 0
        %1670 = vmatpush.bf16.msra.mxu0 0
        %1671 = vmatpush.bf16.msra.mxu0 0
        %1672 = vmatpush.bf16.msra.mxu0 %v1660
        %1673 = vmatpush.bf16.msra.mxu0 %v1659
        %1674 = vmatmul.bf16.gmra.mxu0 %v1664
        %v1675 = vpop.f32.mrf.mxu0
        %v1676 = vadd.f32 %v1070, %v1675
        %v1677 = vpop.f32.mrf.mxu0
        %v1678 = vadd.f32 %v1071, %v1677
        %1679 = vdwg.mxu0
        %v1680 = vld [vmem:[%s695] sm:$0x1]
        %v1681 = vld [vmem:[%s698] sm:$0x1]
        %v1682 = vsel %vm1089, %v1676, 0.0
        %1683 = vadd.xlane.f32.xlu0 %v1682
        %v1684 = vpop.xlane.xlu0 %1683
        %vm1685 = vcmask 254976
        %v1686 = vsel %vm1685, %v1678, 0.0
        %1687 = vadd.xlane.f32.xlu0 %v1686
        %v1688 = vpop.xlane.xlu0 %1687
        %v1689 = vrcp.pop 32.0
        %v1690 = vmul.f32 32.0, %v1689
        %v1691 = vsub.f32 1.0, %v1690
        %v1692 = vmul.f32 %v1689, %v1691
        %v1693 = vadd.f32 %v1689, %v1692
        %vm1694 = vweird.f32 %v1689
        %v1695 = vsel %vm1694, %v1689, %v1693
        %v1696 = vmul.f32 %v1684, %v1695
        %v1697 = vmul.f32 %v1688, %v1695
        %v1698 = vsub.f32 %v1676, %v1696
        %v1699 = vsub.f32 %v1678, %v1697
        %v1700 = vmul.f32 %v1698, %v1698
        %v1701 = vmul.f32 %v1699, %v1699
        %v1702 = vsel %vm1089, %v1700, 0.0
        %1703 = vadd.xlane.f32.xlu0 %v1702
        %v1704 = vpop.xlane.xlu0 %1703
        %v1705 = vsel %vm1685, %v1701, 0.0
        %1706 = vadd.xlane.f32.xlu0 %v1705
        %v1707 = vpop.xlane.xlu0 %1706
        %v1708 = vmul.f32 %v1704, %v1695
        %v1709 = vmul.f32 %v1707, %v1695
        %v1710 = vadd.f32 %v1708, 1e-05
        %v1711 = vadd.f32 %v1709, 1e-05
        %v1712 = vrsqrt.pop %v1710
        %v1713 = vmul.f32 %v1712, %v1710
        %v1714 = vmul.f32 %v1713, %v1712
        %v1715 = vmul.f32 0.5, %v1714
        %v1716 = vsub.f32 1.5, %v1715
        %v1717 = vmul.f32 %v1712, %v1716
        %vm1718 = vweird.f32 %v1710
        %vm1719 = vweird.f32 %v1712
        %vm1720 = vmor %vm1718, %vm1719
        %v1721 = vsel %vm1720, %v1712, %v1717
        %v1722 = vrsqrt.pop %v1711
        %v1723 = vmul.f32 %v1722, %v1711
        %v1724 = vmul.f32 %v1723, %v1722
        %v1725 = vmul.f32 0.5, %v1724
        %v1726 = vsub.f32 1.5, %v1725
        %v1727 = vmul.f32 %v1722, %v1726
        %vm1728 = vweird.f32 %v1711
        %vm1729 = vweird.f32 %v1722
        %vm1730 = vmor %vm1728, %vm1729
        %v1731 = vsel %vm1730, %v1722, %v1727
        %v1732 = vmul.f32 %v1698, %v1721
        %v1733 = vmul.f32 %v1699, %v1731
        %v1735 = vperm.slane %v1680, 0
        %v1737 = vmul.f32 %v1732, %v1735
        %v1738 = vmul.f32 %v1733, %v1735
        %v1740 = vperm.slane %v1681, 0
        %v1742 = vadd.f32 %v1737, %v1740
        %v1743 = vadd.f32 %v1738, %v1740
        %v1744 = vpack.c.bf16 %v1743, %v1742
        %v1745 = vld [vmem:[%s703] sm:$0xf]
        %v1746 = vld [vmem:[%s703 + $0x4] sm:$0xf]
        %v1747 = vld [vmem:[%s703 + $0x8] sm:$0xf]
        %v1748 = vld [vmem:[%s703 + $0xc] sm:$0xf]
        %v1749 = vld [vmem:[%s706] sm:$0x1]
        %v1751 = vperm.slane %v1749, 0
        %v1757 = vunpack.c.l.b16 %v1745
        %v1758 = vunpack.c.l.b16 %v1746
        %v1759 = vunpack.c.l.b16 %v1747
        %v1760 = vunpack.c.l.b16 %v1748
        %v1761 = vpack.c.b16 %v1758, %v1757
        %v1762 = vpack.c.b16 %v1760, %v1759
        %v1766 = vsel %vm1089, %v1744, 0
        %1768 = vmatpush.bf16.msra.mxu0 0
        %1769 = vmatpush.bf16.msra.mxu0 0
        %1770 = vmatpush.bf16.msra.mxu0 0
        %1771 = vmatpush.bf16.msra.mxu0 0
        %1772 = vmatpush.bf16.msra.mxu0 0
        %1773 = vmatpush.bf16.msra.mxu0 0
        %1774 = vmatpush.bf16.msra.mxu0 %v1762
        %1775 = vmatpush.bf16.msra.mxu0 %v1761
        %1776 = vmatmul.bf16.gmra.mxu0 %v1766
        %v1777 = vpop.f32.mrf.mxu0
        %v1778 = vadd.f32 %v1751, %v1777
        %v1779 = vpop.f32.mrf.mxu0
        %v1780 = vadd.f32 %v1751, %v1779
        %1781 = vdwg.mxu0
        %v1782 = vmul.f32 %v1778, 0.5
        %v1783 = vmul.f32 %v1780, 0.5
        %v1784 = vmul.f32 %v1778, 0.70710677
        %v1785 = vmul.f32 %v1780, 0.70710677
        %v1786 = vand.u32 2147483647, %v1784
        %v1787 = vand.u32 2147483647, %v1785
        %v1788 = vmul.f32 %v1786, 0.3275911
        %v1789 = vmul.f32 %v1787, 0.3275911
        %v1790 = vadd.f32 %v1788, 1.0
        %v1791 = vadd.f32 %v1789, 1.0
        %v1792 = vrcp.pop %v1790
        %v1793 = vrcp.pop %v1791
        %v1794 = vmul.f32 %v1792, 1.0614054
        %v1795 = vmul.f32 %v1793, 1.0614054
        %v1796 = vadd.f32 %v1794, -1.4531521
        %v1797 = vadd.f32 %v1795, -1.4531521
        %v1798 = vmul.f32 %v1796, %v1792
        %v1799 = vmul.f32 %v1797, %v1793
        %v1800 = vadd.f32 %v1798, 1.4214138
        %v1801 = vadd.f32 %v1799, 1.4214138
        %v1802 = vmul.f32 %v1800, %v1792
        %v1803 = vmul.f32 %v1801, %v1793
        %v1804 = vadd.f32 %v1802, -0.28449672
        %v1805 = vadd.f32 %v1803, -0.28449672
        %v1806 = vmul.f32 %v1804, %v1792
        %v1807 = vmul.f32 %v1805, %v1793
        %v1808 = vadd.f32 %v1806, 0.2548296
        %v1809 = vadd.f32 %v1807, 0.2548296
        %v1810 = vmul.f32 %v1808, %v1792
        %v1811 = vmul.f32 %v1809, %v1793
        %v1812 = vsub.f32 0.0, %v1786
        %v1813 = vsub.f32 0.0, %v1787
        %v1814 = vmul.f32 %v1812, %v1786
        %v1815 = vmul.f32 %v1813, %v1787
        %v1816 = vmul.f32 %v1814, 1.442695
        %v1817 = vpow.pop %v1816
        %v1818 = vmul.f32 %v1815, 1.442695
        %v1819 = vpow.pop %v1818
        %v1820 = vmul.f32 %v1810, %v1817
        %v1821 = vmul.f32 %v1811, %v1819
        %v1822 = vsub.f32 1.0, %v1820
        %v1823 = vsub.f32 1.0, %v1821
        %vm1824 = vcmp.lt.f32.partialorder %v1784, 0.0
        %vm1825 = vcmp.lt.f32.partialorder %v1785, 0.0
        %v1826 = vsub.f32 0.0, %v1822
        %v1827 = vsub.f32 0.0, %v1823
        %v1828 = vsel %vm1824, %v1826, %v1822
        %v1829 = vsel %vm1825, %v1827, %v1823
        %v1830 = vadd.f32 %v1828, 1.0
        %v1831 = vadd.f32 %v1829, 1.0
        %v1832 = vmul.f32 %v1782, %v1830
        %v1833 = vmul.f32 %v1783, %v1831
        %v1834 = vpack.c.bf16 %v1833, %v1832
        %v1835 = vld [vmem:[%s711] sm:$0xf]
        %v1836 = vld [vmem:[%s711 + $0x4] sm:$0xf]
        %v1837 = vld [vmem:[%s711 + $0x8] sm:$0xf]
        %v1838 = vld [vmem:[%s711 + $0xc] sm:$0xf]
        %v1839 = vld [vmem:[%s711 + $0x10] sm:$0xf]
        %v1840 = vld [vmem:[%s711 + $0x14] sm:$0xf]
        %v1841 = vld [vmem:[%s711 + $0x18] sm:$0xf]
        %v1842 = vld [vmem:[%s711 + $0x1c] sm:$0xf]
        %v1843 = vld [vmem:[%s714] sm:$0x1]
        %v1845 = vperm.slane %v1843, 0
        %v1855 = vunpack.c.l.b16 %v1835
        %v1856 = vunpack.c.l.b16 %v1836
        %v1857 = vunpack.c.l.b16 %v1837
        %v1858 = vunpack.c.l.b16 %v1838
        %v1859 = vunpack.c.l.b16 %v1839
        %v1860 = vunpack.c.l.b16 %v1840
        %v1861 = vunpack.c.l.b16 %v1841
        %v1862 = vunpack.c.l.b16 %v1842
        %v1863 = vpack.c.b16 %v1856, %v1855
        %v1864 = vpack.c.b16 %v1858, %v1857
        %v1865 = vpack.c.b16 %v1860, %v1859
        %v1866 = vpack.c.b16 %v1862, %v1861
        %vm1871 = vcmask 523264
        %v1873 = vsel %vm1871, %v1834, 0
        %1875 = vmatpush.bf16.msra.mxu0 0
        %1876 = vmatpush.bf16.msra.mxu0 0
        %1877 = vmatpush.bf16.msra.mxu0 0
        %1878 = vmatpush.bf16.msra.mxu0 0
        %1879 = vmatpush.bf16.msra.mxu0 %v1866
        %1880 = vmatpush.bf16.msra.mxu0 %v1865
        %1881 = vmatpush.bf16.msra.mxu0 %v1864
        %1882 = vmatpush.bf16.msra.mxu0 %v1863
        %1883 = vmatmul.bf16.gmra.mxu0 %v1873
        %v1884 = vpop.f32.mrf.mxu0
        %v1885 = vadd.f32 %v1845, %v1884
        %v1886 = vpop.f32.mrf.mxu0
        %v1887 = vadd.f32 %v1845, %v1886
        %1888 = vdwg.mxu0
        %v1889 = vadd.f32 %v1885, %v1742
        %v1890 = vadd.f32 %v1887, %v1743
        %v1891 = vld [vmem:[%s717] sm:$0x1]
        %v1892 = vld [vmem:[%s720] sm:$0x1]
        %v1893 = vsel %vm1089, %v1889, 0.0
        %1894 = vadd.xlane.f32.xlu0 %v1893
        %v1895 = vpop.xlane.xlu0 %1894
        %v1896 = vsel %vm1685, %v1890, 0.0
        %1897 = vadd.xlane.f32.xlu0 %v1896
        %v1898 = vpop.xlane.xlu0 %1897
        %v1899 = vmul.f32 %v1895, %v1695
        %v1900 = vmul.f32 %v1898, %v1695
        %v1901 = vsub.f32 %v1889, %v1899
        %v1902 = vsub.f32 %v1890, %v1900
        %v1903 = vmul.f32 %v1901, %v1901
        %v1904 = vmul.f32 %v1902, %v1902
        %v1905 = vsel %vm1089, %v1903, 0.0
        %1906 = vadd.xlane.f32.xlu0 %v1905
        %v1907 = vpop.xlane.xlu0 %1906
        %v1908 = vsel %vm1685, %v1904, 0.0
        %1909 = vadd.xlane.f32.xlu0 %v1908
        %v1910 = vpop.xlane.xlu0 %1909
        %v1911 = vmul.f32 %v1907, %v1695
        %v1912 = vmul.f32 %v1910, %v1695
        %v1913 = vadd.f32 %v1911, 1e-05
        %v1914 = vadd.f32 %v1912, 1e-05
        %v1915 = vrsqrt.pop %v1913
        %v1916 = vmul.f32 %v1915, %v1913
        %v1917 = vmul.f32 %v1916, %v1915
        %v1918 = vmul.f32 0.5, %v1917
        %v1919 = vsub.f32 1.5, %v1918
        %v1920 = vmul.f32 %v1915, %v1919
        %vm1921 = vweird.f32 %v1913
        %vm1922 = vweird.f32 %v1915
        %vm1923 = vmor %vm1921, %vm1922
        %v1924 = vsel %vm1923, %v1915, %v1920
        %v1925 = vrsqrt.pop %v1914
        %v1926 = vmul.f32 %v1925, %v1914
        %v1927 = vmul.f32 %v1926, %v1925
        %v1928 = vmul.f32 0.5, %v1927
        %v1929 = vsub.f32 1.5, %v1928
        %v1930 = vmul.f32 %v1925, %v1929
        %vm1931 = vweird.f32 %v1914
        %vm1932 = vweird.f32 %v1925
        %vm1933 = vmor %vm1931, %vm1932
        %v1934 = vsel %vm1933, %v1925, %v1930
        %v1935 = vmul.f32 %v1901, %v1924
        %v1936 = vmul.f32 %v1902, %v1934
        %v1938 = vperm.slane %v1891, 0
        %v1940 = vmul.f32 %v1935, %v1938
        %v1941 = vmul.f32 %v1936, %v1938
        %v1943 = vperm.slane %v1892, 0
        %v1945 = vadd.f32 %v1940, %v1943
        %v1946 = vadd.f32 %v1941, %v1943
        %1947 = vst.msk [vmem:[#allocation2] sm:$0xff] %vm1089, %v1945
        %1948 = vst.msk [vmem:[#allocation2 + $0x8] sm:$0x3] %vm1685, %v1946
        %p1949 = scmp.eq.s32.totalorder %s34, 1
        // Predicated region
        $region93: #{pallas_vit_forward.1} parent=87 // pred_check
          %p1950 = pneg %p1949
        $region94: #{pallas_vit_forward.1} parent=87 // pred_check_branch
          %1952 = sbr.rel (%p1950) target = $region96
        $region95: #{pallas_vit_forward.1} parent=87 // pred_region
          %v1953 = vld [vmem:[#allocation2] sm:$0x1]
          %v1954 = vpack.c.bf16 %v1953, %v1953
          %v1955 = vld [vmem:[%s15] sm:$0xf]
          %v1956 = vld [vmem:[%s15 + $0x4] sm:$0xf]
          %v1957 = vld [vmem:[%s15 + $0x8] sm:$0xf]
          %v1958 = vld [vmem:[%s15 + $0xc] sm:$0xf]
          %v1959 = vld [vmem:[%s16] sm:$0x1]
          %v1964 = vunpack.c.l.b16 %v1955
          %v1965 = vunpack.c.l.b16 %v1956
          %v1966 = vunpack.c.l.b16 %v1957
          %v1967 = vunpack.c.l.b16 %v1958
          %v1968 = vpack.c.b16 %v1965, %v1964
          %v1969 = vpack.c.b16 %v1967, %v1966
          %v1973 = vsel %vm1089, %v1954, 0
          %1975 = vmatpush.bf16.msra.mxu0 0
          %1976 = vmatpush.bf16.msra.mxu0 0
          %1977 = vmatpush.bf16.msra.mxu0 0
          %1978 = vmatpush.bf16.msra.mxu0 0
          %1979 = vmatpush.bf16.msra.mxu0 0
          %1980 = vmatpush.bf16.msra.mxu0 0
          %1981 = vmatpush.bf16.msra.mxu0 %v1969
          %1982 = vmatpush.bf16.msra.mxu0 %v1968
          %1983 = vmatmul.bf16.gmra.mxu0 %v1973
          %v1984 = vpop.f32.mrf.mxu0
          %v1985 = vadd.f32 %v1959, %v1984
          %v1986 = vpop.f32.mrf.mxu0
          %1987 = vdwg.mxu0
          %vm1988 = vcmask 73728
          %1989 = vst.msk [vmem:[#allocation5] sm:$0x1] %vm1988, %v1985
          %v1990 = vld [vmem:[#allocation2 + $0x5] sm:$0x1]
          %v1991 = vpack.c.bf16 %v1990, %v1990
          %v1992 = vld [vmem:[%s15] sm:$0xf]
          %v1993 = vld [vmem:[%s15 + $0x4] sm:$0xf]
          %v1994 = vld [vmem:[%s15 + $0x8] sm:$0xf]
          %v1995 = vld [vmem:[%s15 + $0xc] sm:$0xf]
          %v1996 = vld [vmem:[%s16] sm:$0x1]
          %v2001 = vunpack.c.l.b16 %v1992
          %v2002 = vunpack.c.l.b16 %v1993
          %v2003 = vunpack.c.l.b16 %v1994
          %v2004 = vunpack.c.l.b16 %v1995
          %v2005 = vpack.c.b16 %v2002, %v2001
          %v2006 = vpack.c.b16 %v2004, %v2003
          %v2010 = vsel %vm1089, %v1991, 0
          %2012 = vmatpush.bf16.msra.mxu0 0
          %2013 = vmatpush.bf16.msra.mxu0 0
          %2014 = vmatpush.bf16.msra.mxu0 0
          %2015 = vmatpush.bf16.msra.mxu0 0
          %2016 = vmatpush.bf16.msra.mxu0 0
          %2017 = vmatpush.bf16.msra.mxu0 0
          %2018 = vmatpush.bf16.msra.mxu0 %v2006
          %2019 = vmatpush.bf16.msra.mxu0 %v2005
          %2020 = vmatmul.bf16.gmra.mxu0 %v2010
          %v2021 = vpop.f32.mrf.mxu0
          %v2022 = vadd.f32 %v1996, %v2021
          %v2023 = vpop.f32.mrf.mxu0
          %2024 = vdwg.mxu0
          %s2025 = scalar_lea.vmem [#allocation5], 1
          %2026 = vst.msk [vmem:[%s2025] sm:$0x1] %vm1988, %v2022
        $region96: #{pallas_vit_forward.1} parent=87 // pred_fallthru
          _
        // Predicated region
        $region97: #{pallas_vit_forward.1} parent=87 // pred_check
          %p2027 = pneg %p471
        $region98: #{pallas_vit_forward.1} parent=87 // pred_check_branch
          %2029 = sbr.rel (%p2027) target = $region100
        $region99: #{pallas_vit_forward.1} parent=87 // pred_region
          %s2030 = smul.u32 2, %s33
          %2032 = vsyncadd [#allocation6], 0
          %s2033 = scalar_lea.hbm %s17, %s2030
          %s2034 = sshll.u32 [#allocation5], 4
          %s2035 = int_to_ptr.vmem [resolvable:$true] %s2034
          %s2036 = sshll.u32 %s2033, 4
          %s2037 = int_to_ptr.hbm [resolvable:$true] %s2036
          %2042 = dma.vmem_to_hbm [thread:$0]  %s2035, 32, %s2037, [#allocation6], 16, 16, 1
        $region100: #{pallas_vit_forward.1} parent=87 // pred_fallthru
          _
        // Predicated region
        $region101: #{pallas_vit_forward.1} parent=87 // pred_check
          %p2043 = pneg %p471
        $region102: #{pallas_vit_forward.1} parent=87 // pred_check_branch
          %2045 = sbr.rel (%p2043) target = $region104
        $region103: #{pallas_vit_forward.1} parent=87 // pred_region
          %2047 = dma.done [#allocation6], 32
        $region104: #{pallas_vit_forward.1} parent=87 // pred_fallthru
          _
      $region88: #{pallas_vit_forward.1} parent=5 // pred_fallthru
        _
      %p2048 = scmp.le.s32.totalorder 2, %s24
      // Predicated region
      $region105: #{pallas_vit_forward.1} parent=5 // pred_check
        %p2049 = pneg %p2048
      $region106: #{pallas_vit_forward.1} parent=5 // pred_check_branch
        %2051 = sbr.rel (%p2049) target = $region108
      $region107: #{pallas_vit_forward.1} parent=5 // pred_region
        %s2052 = ssub.s32 %s24, 2
      $region108: #{pallas_vit_forward.1} parent=5 // pred_fallthru
        _
    $region6: #{pallas_vit_forward.1} parent=1 // loop_footer
      %s28 = sadd.s32 1, %s24
    $region7: #{pallas_vit_forward.1} parent=1 // loop_footer_branch
      %23 = sbr.rel target = $region3
    $region8: #{pallas_vit_forward.1} parent=1 // loop_exit
      _
    %2053 = vsyncpa [#allocation6], 1
    %s2054 = scalar_lea.sflag [#allocation6], 1
    %2055 = vsyncpa %s2054, 1

</llo_original>
